<compile_context>
chip_gen: v7x
topology: tpu7x:2x2x1
jax: 0.10.0
libtpu: 0.0.40
codegen_flags: <defaults>
</compile_context>

<pallas_src>
import jax
import jax.numpy as jnp
from jax.experimental import pallas as pl
from jax.experimental.pallas import tpu as pltpu

# Logical (PyTorch) dims and lane-padded dims.
D_IN, H1, H2, H3, D_OUT = 426, 300, 200, 100, 6
H1_P, H2_P, H3_P, D_OUT_P = 384, 256, 128, 8     # x keeps its native 426 lanes
_MAX_TM = 2048                                   # max batch-tile rows


def _round_up(n, m):
    return (n + m - 1) // m * m


def _cdiv(a, b):
    return (a + b - 1) // b


def _pick_tile(batch):
    """Batch-tile heuristic.

    * batch <= 64: one grid step (latency path, weight DMA dominates anyway).
    * batch  > 64: split into an even number (>= 2) of roughly equal tiles of
      at most _MAX_TM rows, so the "parallel" grid axis gives both v7x
      TensorCores balanced work while keeping per-step overhead (~0.35us)
      negligible.
    """
    b8 = _round_up(max(batch, 1), 8)
    if batch <= 64:
        return b8
    n_steps = max(2, _cdiv(b8, _MAX_TM))
    n_steps += n_steps & 1                        # even step count -> balanced TCs
    return _round_up(_cdiv(b8, n_steps), 8)


def _pad2(a, rows, cols):
    return jnp.pad(a, ((0, rows - a.shape[0]), (0, cols - a.shape[1])))


# ----------------------------------------------------------------------------
# One-time feature probe: single-buffered (Buffered(1)) grid-invariant inputs.
# The broad except here is intentional and safe: it only wraps a trivial probe
# kernel, and any failure simply means "feature unavailable" -> default
# double-buffered specs.  The real kernel is never wrapped in try/except.
# ----------------------------------------------------------------------------
_SINGLE_BUFFER_OK = None


def _probe_copy_kernel(x_ref, o_ref):
    o_ref[...] = x_ref[...]


def _single_buffer_resident_supported():
    global _SINGLE_BUFFER_OK
    if _SINGLE_BUFFER_OK is None:
        try:
            spec = pl.BlockSpec((8, 128), lambda i: (0, 0),
                                pipeline_mode=pl.Buffered(buffer_count=1))
            fn = pl.pallas_call(
                _probe_copy_kernel,
                out_shape=jax.ShapeDtypeStruct((8, 128), jnp.float32),
                grid=(2,),
                in_specs=[spec],
                out_specs=pl.BlockSpec((8, 128), lambda i: (0, 0)),
            )
            jax.block_until_ready(fn(jnp.ones((8, 128), jnp.float32)))
            _SINGLE_BUFFER_OK = True
        except Exception:
            _SINGLE_BUFFER_OK = False
    return _SINGLE_BUFFER_OK


# ----------------------------------------------------------------------------
# Kernel
# ----------------------------------------------------------------------------
def mlp_kernel(x_ref, w1_ref, b1_ref, w2_ref, b2_ref, w3_ref, b3_ref,
               w4_ref, b4_ref, o_ref):
    """Whole 4-layer MLP forward on one batch tile, entirely in VMEM.

    Weights arrive pre-cast to bf16; x is cast to bf16 here (avoids an extra
    HBM cast pass in the wrapper).  All matmuls accumulate in f32 on the MXU;
    bias adds / relu / exp run in f32.
    """
    x = x_ref[...].astype(jnp.bfloat16)                                  # (tm, 426)
    h = jnp.dot(x, w1_ref[...], preferred_element_type=jnp.float32) + b1_ref[...]
    h = jnp.maximum(h, 0.0).astype(jnp.bfloat16)                         # relu(fc1)
    h = jnp.dot(h, w2_ref[...], preferred_element_type=jnp.float32) + b2_ref[...]
    h = jnp.maximum(h, 0.0).astype(jnp.bfloat16)                         # relu(fc2)
    h = jnp.dot(h, w3_ref[...], preferred_element_type=jnp.float32) + b3_ref[...]
    h = jnp.maximum(h, 0.0).astype(jnp.bfloat16)                         # relu(fc3)
    h = jnp.dot(h, w4_ref[...], preferred_element_type=jnp.float32) + b4_ref[...]
    o_ref[...] = jnp.exp(h)                                              # exp(fc4) -> EUP


# ----------------------------------------------------------------------------
# Wrapper
# ----------------------------------------------------------------------------
def prepare_params(params):
    """Pad + cast weights/biases ONCE (call outside the hot path).

    params: [(w1,b1),...,(w4,b4)] with w_i shaped (fan_in, fan_out) f32
            (i.e. PyTorch weight transposed).
    Padded rows/cols are exact zeros, so the live output columns stay
    identical (up to bf16 rounding of the live entries themselves).
    """
    (w1, b1), (w2, b2), (w3, b3), (w4, b4) = params
    w1p = _pad2(w1, D_IN, H1_P).astype(jnp.bfloat16)      # (426, 384)
    w2p = _pad2(w2, H1_P, H2_P).astype(jnp.bfloat16)      # (384, 256)
    w3p = _pad2(w3, H2_P, H3_P).astype(jnp.bfloat16)      # (256, 128)
    w4p = _pad2(w4, H3_P, D_OUT_P).astype(jnp.bfloat16)   # (128, 8)
    b1p = jnp.pad(b1, (0, H1_P - H1)).astype(jnp.float32).reshape(1, H1_P)
    b2p = jnp.pad(b2, (0, H2_P - H2)).astype(jnp.float32).reshape(1, H2_P)
    b3p = jnp.pad(b3, (0, H3_P - H3)).astype(jnp.float32).reshape(1, H3_P)
    b4p = jnp.pad(b4, (0, D_OUT_P - D_OUT)).astype(jnp.float32).reshape(1, D_OUT_P)
    return (w1p, b1p, w2p, b2p, w3p, b3p, w4p, b4p)


def net_forward(x, prepared, *, tm=None):
    """x: (B, 426) float32 -> (B, 6) float32.  `prepared` = prepare_params(...)."""
    B, d_in = x.shape
    assert d_in == D_IN, f"expected {D_IN} input features, got {d_in}"
    w1p, b1p, w2p, b2p, w3p, b3p, w4p, b4p = prepared

    if tm is None:
        tm = _pick_tile(B)
    tm = max(8, _round_up(tm, 8))
    Bp = _round_up(B, tm)
    # Row-pad only when the batch is not a tile multiple (zero-cost otherwise).
    xp = x if Bp == B else jnp.pad(x, ((0, Bp - B), (0, 0)))

    use_single = _single_buffer_resident_supported()

    def res(shape):
        # Grid-invariant block (index_map always (0,0)) -> resident in VMEM;
        # single-buffer it when the JAX build supports Buffered(1).
        if use_single:
            return pl.BlockSpec(shape, lambda i: (0, 0),
                                pipeline_mode=pl.Buffered(buffer_count=1))
        return pl.BlockSpec(shape, lambda i: (0, 0))

    grid_spec = pltpu.PrefetchScalarGridSpec(
        num_scalar_prefetch=0,
        grid=(Bp // tm,),
        in_specs=[
            # x batch tile: full 426-lane extent -> no HBM-side feature pad.
            pl.BlockSpec((tm, D_IN), lambda i: (i, 0)),
            res((D_IN, H1_P)), res((1, H1_P)),
            res((H1_P, H2_P)), res((1, H2_P)),
            res((H2_P, H3_P)), res((1, H3_P)),
            res((H3_P, D_OUT_P)), res((1, D_OUT_P)),
        ],
        out_specs=pl.BlockSpec((tm, D_OUT_P), lambda i: (i, 0)),
    )

    flops = 2 * Bp * (D_IN * H1 + H1 * H2 + H2 * H3 + H3 * D_OUT)
    bytes_accessed = (int(xp.size) * xp.dtype.itemsize
                      + sum(int(a.size) * a.dtype.itemsize for a in prepared)
                      + Bp * D_OUT_P * 4)

    out = pl.pallas_call(
        mlp_kernel,
        out_shape=jax.ShapeDtypeStruct((Bp, D_OUT_P), jnp.float32),
        grid_spec=grid_spec,
        compiler_params=pltpu.CompilerParams(
            dimension_semantics=("parallel",)),
        cost_estimate=pl.CostEstimate(
            flops=flops,
            transcendentals=Bp * D_OUT,
            bytes_accessed=bytes_accessed),
    )(xp, w1p, b1p, w2p, b2p, w3p, b3p, w4p, b4p)

    return out[:B, :D_OUT]                      # drop batch + lane padding


# ----------------------------------------------------------------------------
# Init + references
# ----------------------------------------------------------------------------
def init_params(key):
    """Deterministic init mimicking PyTorch Linear default U(-1/sqrt(fan_in), +).

    Weights are stored (fan_in, fan_out) so the kernel computes x @ W + b,
    matching PyTorch's x @ W_pt.T + b.
    """
    dims = [(D_IN, H1), (H1, H2), (H2, H3), (H3, D_OUT)]
    params = []
    for (fan_in, fan_out) in dims:
        key, kw, kb = jax.random.split(key, 3)
        bound = 1.0 / jnp.sqrt(fan_in)
        w = jax.random.uniform(kw, (fan_in, fan_out), jnp.float32, -bound, bound)
        b = jax.random.uniform(kb, (fan_out,), jnp.float32, -bound, bound)
        params.append((w, b))
    return params


def _reference_f32(x, params):
    (w1, b1), (w2, b2), (w3, b3), (w4, b4) = params
    h = jnp.maximum(x @ w1 + b1, 0.0)
    h = jnp.maximum(h @ w2 + b2, 0.0)
    h = jnp.maximum(h @ w3 + b3, 0.0)
    return jnp.exp(h @ w4 + b4)


def _reference_bf16(x, params):
    """Same bf16-operand / f32-accumulate math as the kernel."""
    (w1, b1), (w2, b2), (w3, b3), (w4, b4) = params

    def lin(h, w, b):
        return jnp.dot(h.astype(jnp.bfloat16), w.astype(jnp.bfloat16),
                       preferred_element_type=jnp.float32) + b

    h = jnp.maximum(lin(x, w1, b1), 0.0)
    h = jnp.maximum(lin(h, w2, b2), 0.0)
    h = jnp.maximum(lin(h, w3, b3), 0.0)
    return jnp.exp(lin(h, w4, b4))


if __name__ == "__main__":
    key = jax.random.PRNGKey(0)
    key, kx1, kx2, kx3 = jax.random.split(key, 4)
    params = init_params(key)
    prepared = prepare_params(params)           # pad + bf16-cast once

    def check(x, name):
        out = jax.block_until_ready(net_forward(x, prepared))
        assert out.shape == (x.shape[0], D_OUT)
        r_bf16 = _reference_bf16(x, params)     # same bf16-operand math
        r_f32 = _reference_f32(x, params)       # exact f32 PyTorch-equivalent
        assert jnp.allclose(out, r_bf16, rtol=5e-3, atol=1e-5), \
            f"mismatch vs bf16 reference ({name})"
        assert jnp.allclose(out, r_f32, rtol=5e-2, atol=1e-3), \
            f"mismatch vs f32 reference ({name})"
        return out

    # Small deterministic example (single grid step, tm = 16).
    check(jax.random.normal(kx1, (16, D_IN), jnp.float32), "B=16")
    # Ragged batch exercising the row-pad + slice path (tm = 56, Bp = 56).
    check(jax.random.normal(kx3, (50, D_IN), jnp.float32), "B=50")
    # Larger batch exercising the 2-step "parallel" grid (tm = 192).
    check(jax.random.normal(kx2, (384, D_IN), jnp.float32), "B=384")

    print("KERNEL_OK")
</pallas_src>

<mosaic_0001>
module attributes {stable_mosaic.version = 11 : i64} {
  func.func @_probe_copy_kernel(%arg0: i32, %arg1: memref<8x128xf32, #tpu.memory_space<vmem>>, %arg2: memref<8x128xf32, #tpu.memory_space<vmem>>) attributes {dimension_semantics = [#tpu.dimension_semantics<arbitrary>], iteration_bounds = array<i64: 2>, scalar_prefetch = 0 : i64, scratch_operands = 0 : i64, tpu.core_type = #tpu.core_type<tc>, window_params = [{pipeline_mode = #tpu.pipeline_mode<synchronous>, transform_indices = @transform_0, window_bounds = array<i64: 8, 128>}, {pipeline_mode = #tpu.pipeline_mode<synchronous>, transform_indices = @transform_1, window_bounds = array<i64: 8, 128>}]} {
    %c0 = arith.constant 0 : index
    %c0_0 = arith.constant 0 : index
    %0 = vector.load %arg1[%c0, %c0_0] : memref<8x128xf32, #tpu.memory_space<vmem>>, vector<8x128xf32>
    %c0_1 = arith.constant 0 : index
    %c0_2 = arith.constant 0 : index
    %1 = vector.load %arg2[%c0_1, %c0_2] : memref<8x128xf32, #tpu.memory_space<vmem>>, vector<8x128xf32>
    tpu.vector_store %arg2[%c0_1, %c0_2], %0 {strides = array<i32>} : memref<8x128xf32, #tpu.memory_space<vmem>>, vector<8x128xf32>,
    return
  }
  func.func @transform_0(%arg0: i32) -> (i32, i32) {
    %c0_i32 = arith.constant 0 : i32
    %c0_i32_0 = arith.constant 0 : i32
    %c0_i32_1 = arith.constant 0 : i32
    return %c0_i32, %c0_i32_0 : i32, i32
  }
  func.func @transform_1(%arg0: i32) -> (i32, i32) {
    %c0_i32 = arith.constant 0 : i32
    %c0_i32_0 = arith.constant 0 : i32
    %c0_i32_1 = arith.constant 0 : i32
    return %c0_i32, %c0_i32_0 : i32, i32
  }
}

module attributes {stable_mosaic.version = 11 : i64} {
  func.func @mlp_kernel(%arg0: i32, %arg1: memref<16x426xf32, #tpu.memory_space<vmem>>, %arg2: memref<426x384xbf16, #tpu.memory_space<vmem>>, %arg3: memref<1x384xf32, #tpu.memory_space<vmem>>, %arg4: memref<384x256xbf16, #tpu.memory_space<vmem>>, %arg5: memref<1x256xf32, #tpu.memory_space<vmem>>, %arg6: memref<256x128xbf16, #tpu.memory_space<vmem>>, %arg7: memref<1x128xf32, #tpu.memory_space<vmem>>, %arg8: memref<128x8xbf16, #tpu.memory_space<vmem>>, %arg9: memref<1x8xf32, #tpu.memory_space<vmem>>, %arg10: memref<16x8xf32, #tpu.memory_space<vmem>>) attributes {dimension_semantics = [#tpu.dimension_semantics<parallel>], iteration_bounds = array<i64: 1>, scalar_prefetch = 0 : i64, scratch_operands = 0 : i64, tpu.core_type = #tpu.core_type<tc>, window_params = [{transform_indices = @transform_0, window_bounds = array<i64: 16, 426>}, {pipeline_mode = #tpu.pipeline_mode<synchronous>, transform_indices = @transform_1, window_bounds = array<i64: 426, 384>}, {pipeline_mode = #tpu.pipeline_mode<synchronous>, transform_indices = @transform_2, window_bounds = array<i64: 1, 384>}, {pipeline_mode = #tpu.pipeline_mode<synchronous>, transform_indices = @transform_3, window_bounds = array<i64: 384, 256>}, {pipeline_mode = #tpu.pipeline_mode<synchronous>, transform_indices = @transform_4, window_bounds = array<i64: 1, 256>}, {pipeline_mode = #tpu.pipeline_mode<synchronous>, transform_indices = @transform_5, window_bounds = array<i64: 256, 128>}, {pipeline_mode = #tpu.pipeline_mode<synchronous>, transform_indices = @transform_6, window_bounds = array<i64: 1, 128>}, {pipeline_mode = #tpu.pipeline_mode<synchronous>, transform_indices = @transform_7, window_bounds = array<i64: 128, 8>}, {pipeline_mode = #tpu.pipeline_mode<synchronous>, transform_indices = @transform_8, window_bounds = array<i64: 1, 8>}, {transform_indices = @transform_9, window_bounds = array<i64: 16, 8>}]} {
    %c0 = arith.constant 0 : index
    %c0_0 = arith.constant 0 : index
    %0 = vector.load %arg1[%c0, %c0_0] : memref<16x426xf32, #tpu.memory_space<vmem>>, vector<16x426xf32>
    %1 = arith.truncf %0 : vector<16x426xf32> to vector<16x426xbf16>
    %c0_1 = arith.constant 0 : index
    %c0_2 = arith.constant 0 : index
    %2 = vector.load %arg2[%c0_1, %c0_2] : memref<426x384xbf16, #tpu.memory_space<vmem>>, vector<426x384xbf16>
    %cst = arith.constant dense<0.000000e+00> : vector<16x384xf32>
    %3 = tpu.matmul %1, %2, %cst {dimension_numbers = #tpu.dot_dimension_numbers<[1], [0], [0], [1], [0, 0, 1, 1], [], []>} : vector<16x426xbf16>, vector<426x384xbf16>, vector<16x384xf32> -> vector<16x384xf32>
    %c0_3 = arith.constant 0 : index
    %c0_4 = arith.constant 0 : index
    %4 = vector.load %arg3[%c0_3, %c0_4] : memref<1x384xf32, #tpu.memory_space<vmem>>, vector<1x384xf32>
    %5 = vector.broadcast %4 : vector<1x384xf32> to vector<16x384xf32>
    %6 = arith.addf %3, %5 : vector<16x384xf32>
    %cst_5 = arith.constant 0.000000e+00 : f32
    %7 = vector.broadcast %cst_5 : f32 to vector<16x384xf32>
    %8 = arith.maximumf %6, %7 : vector<16x384xf32>
    %9 = arith.truncf %8 : vector<16x384xf32> to vector<16x384xbf16>
    %c0_6 = arith.constant 0 : index
    %c0_7 = arith.constant 0 : index
    %10 = vector.load %arg4[%c0_6, %c0_7] : memref<384x256xbf16, #tpu.memory_space<vmem>>, vector<384x256xbf16>
    %cst_8 = arith.constant dense<0.000000e+00> : vector<16x256xf32>
    %11 = tpu.matmul %9, %10, %cst_8 {dimension_numbers = #tpu.dot_dimension_numbers<[1], [0], [0], [1], [0, 0, 1, 1], [], []>} : vector<16x384xbf16>, vector<384x256xbf16>, vector<16x256xf32> -> vector<16x256xf32>
    %c0_9 = arith.constant 0 : index
    %c0_10 = arith.constant 0 : index
    %12 = vector.load %arg5[%c0_9, %c0_10] : memref<1x256xf32, #tpu.memory_space<vmem>>, vector<1x256xf32>
    %13 = vector.broadcast %12 : vector<1x256xf32> to vector<16x256xf32>
    %14 = arith.addf %11, %13 : vector<16x256xf32>
    %cst_11 = arith.constant 0.000000e+00 : f32
    %15 = vector.broadcast %cst_11 : f32 to vector<16x256xf32>
    %16 = arith.maximumf %14, %15 : vector<16x256xf32>
    %17 = arith.truncf %16 : vector<16x256xf32> to vector<16x256xbf16>
    %c0_12 = arith.constant 0 : index
    %c0_13 = arith.constant 0 : index
    %18 = vector.load %arg6[%c0_12, %c0_13] : memref<256x128xbf16, #tpu.memory_space<vmem>>, vector<256x128xbf16>
    %cst_14 = arith.constant dense<0.000000e+00> : vector<16x128xf32>
    %19 = tpu.matmul %17, %18, %cst_14 {dimension_numbers = #tpu.dot_dimension_numbers<[1], [0], [0], [1], [0, 0, 1, 1], [], []>} : vector<16x256xbf16>, vector<256x128xbf16>, vector<16x128xf32> -> vector<16x128xf32>
    %c0_15 = arith.constant 0 : index
    %c0_16 = arith.constant 0 : index
    %20 = vector.load %arg7[%c0_15, %c0_16] : memref<1x128xf32, #tpu.memory_space<vmem>>, vector<1x128xf32>
    %21 = vector.broadcast %20 : vector<1x128xf32> to vector<16x128xf32>
    %22 = arith.addf %19, %21 : vector<16x128xf32>
    %cst_17 = arith.constant 0.000000e+00 : f32
    %23 = vector.broadcast %cst_17 : f32 to vector<16x128xf32>
    %24 = arith.maximumf %22, %23 : vector<16x128xf32>
    %25 = arith.truncf %24 : vector<16x128xf32> to vector<16x128xbf16>
    %c0_18 = arith.constant 0 : index
    %c0_19 = arith.constant 0 : index
    %26 = vector.load %arg8[%c0_18, %c0_19] : memref<128x8xbf16, #tpu.memory_space<vmem>>, vector<128x8xbf16>
    %cst_20 = arith.constant dense<0.000000e+00> : vector<16x8xf32>
    %27 = tpu.matmul %25, %26, %cst_20 {dimension_numbers = #tpu.dot_dimension_numbers<[1], [0], [0], [1], [0, 0, 1, 1], [], []>} : vector<16x128xbf16>, vector<128x8xbf16>, vector<16x8xf32> -> vector<16x8xf32>
    %c0_21 = arith.constant 0 : index
    %c0_22 = arith.constant 0 : index
    %28 = vector.load %arg9[%c0_21, %c0_22] : memref<1x8xf32, #tpu.memory_space<vmem>>, vector<1x8xf32>
    %29 = vector.broadcast %28 : vector<1x8xf32> to vector<16x8xf32>
    %30 = arith.addf %27, %29 : vector<16x8xf32>
    %31 = math.exp %30 : vector<16x8xf32>
    %c0_23 = arith.constant 0 : index
    %c0_24 = arith.constant 0 : index
    %32 = vector.load %arg10[%c0_23, %c0_24] : memref<16x8xf32, #tpu.memory_space<vmem>>, vector<16x8xf32>
    tpu.vector_store %arg10[%c0_23, %c0_24], %31 {strides = array<i32>} : memref<16x8xf32, #tpu.memory_space<vmem>>, vector<16x8xf32>,
    return
  }
  func.func @transform_0(%arg0: i32) -> (i32, i32) {
    %c0_i32 = arith.constant 0 : i32
    %c0_i32_0 = arith.constant 0 : i32
    return %arg0, %c0_i32 : i32, i32
  }
  func.func @transform_1(%arg0: i32) -> (i32, i32) {
    %c0_i32 = arith.constant 0 : i32
    %c0_i32_0 = arith.constant 0 : i32
    %c0_i32_1 = arith.constant 0 : i32
    return %c0_i32, %c0_i32_0 : i32, i32
  }
  func.func @transform_2(%arg0: i32) -> (i32, i32) {
    %c0_i32 = arith.constant 0 : i32
    %c0_i32_0 = arith.constant 0 : i32
    %c0_i32_1 = arith.constant 0 : i32
    return %c0_i32, %c0_i32_0 : i32, i32
  }
  func.func @transform_3(%arg0: i32) -> (i32, i32) {
    %c0_i32 = arith.constant 0 : i32
    %c0_i32_0 = arith.constant 0 : i32
    %c0_i32_1 = arith.constant 0 : i32
    return %c0_i32, %c0_i32_0 : i32, i32
  }
  func.func @transform_4(%arg0: i32) -> (i32, i32) {
    %c0_i32 = arith.constant 0 : i32
    %c0_i32_0 = arith.constant 0 : i32
    %c0_i32_1 = arith.constant 0 : i32
    return %c0_i32, %c0_i32_0 : i32, i32
  }
  func.func @transform_5(%arg0: i32) -> (i32, i32) {
    %c0_i32 = arith.constant 0 : i32
    %c0_i32_0 = arith.constant 0 : i32
    %c0_i32_1 = arith.constant 0 : i32
    return %c0_i32, %c0_i32_0 : i32, i32
  }
  func.func @transform_6(%arg0: i32) -> (i32, i32) {
    %c0_i32 = arith.constant 0 : i32
    %c0_i32_0 = arith.constant 0 : i32
    %c0_i32_1 = arith.constant 0 : i32
    return %c0_i32, %c0_i32_0 : i32, i32
  }
  func.func @transform_7(%arg0: i32) -> (i32, i32) {
    %c0_i32 = arith.constant 0 : i32
    %c0_i32_0 = arith.constant 0 : i32
    %c0_i32_1 = arith.constant 0 : i32
    return %c0_i32, %c0_i32_0 : i32, i32
  }
  func.func @transform_8(%arg0: i32) -> (i32, i32) {
    %c0_i32 = arith.constant 0 : i32
    %c0_i32_0 = arith.constant 0 : i32
    %c0_i32_1 = arith.constant 0 : i32
    return %c0_i32, %c0_i32_0 : i32, i32
  }
  func.func @transform_9(%arg0: i32) -> (i32, i32) {
    %c0_i32 = arith.constant 0 : i32
    %c0_i32_0 = arith.constant 0 : i32
    return %arg0, %c0_i32 : i32, i32
  }
}

</mosaic_0001>

<llo_original>
// kernel: tpu_custom_call.1
$region0: #{tpu_custom_call.1}
  #allocation0 [shape = 'u32[]', space=smem, size = 0x4, offset = 0x4, fixed_abs, tag = 'smem constant byte address 0x4 - core index']
  #allocation1 [shape = 'u32[144,128]{1,0:T(1,128)}', space=vmem, size = 0x12000, scoped, tag = 'internal scratch']
  %s0 = inlined_call_operand.hbm [shape: f32[8,128], index: 0, kind: input, shape index: {}]
  %s1 = inlined_call_operand.hbm [shape: f32[8,128], index: 1, kind: output, shape index: {}]
  %s2 = sld [smem:[#allocation0]]
  $region41: #{tpu_custom_call.1} parent=0
    _
  %s4 = ssub.s32 1, %s2
  %s5 = scalar_select 0, %s4, %s2
  $region1: #{tpu_custom_call.1} parent=0
    #allocation2 [shape = 'u8[4096]{0}', space=vmem, size = 0x1000, scoped, tag = 'input window, operand 0, single buffered']
    #allocation3 [shape = 's32[2]{0}', space=sflag, size = 0x8, scoped, tag = 'scoped memory for tpu_custom_call.1']
    #allocation4 [shape = 's32[2]{0}', space=sflag, size = 0x8, scoped, tag = 'scoped memory for tpu_custom_call.1']
    #allocation5 [shape = 'u8[4096]{0}', space=vmem, size = 0x1000, scoped, tag = 'output window, operand 0, single buffered']
    %6 = vsyncpa [#allocation3], 0
    %7 = vsyncpa [#allocation4], 0
    loop: start=0, step=1, limit=4
    $region2: #{tpu_custom_call.1} parent=1 // loop_pre_header
      _
    $region3: #{tpu_custom_call.1} parent=1 // loop_header
      %s9 = sphi 0, %s13
      %p10 = scmp.ge.s32.totalorder %s9, 4
      %s17 = sphi 0, %s17
      %s19 = sphi 0, %s17
      %s20 = sphi 0, %s19
      %s34 = sphi 0, %s20
      %s38 = sphi 0, %s38
      %s40 = sphi 0, %s38
      %s41 = sphi 0, %s40
      %s55 = sphi 0, %s41
    $region4: #{tpu_custom_call.1} parent=1 // loop_header_branch
      %12 = sbr.rel (%p10) target = $region8
    $region5: #{tpu_custom_call.1} parent=1 // loop_body
      %s14 = ssub.s32 %s9, 1
      %s15 = ssub.s32 %s9, 2
      %s16 = sadd.s32 %s9, 1
      %s18 = sadd.s32 %s17, 1
      %p21 = scmp.eq.s32.totalorder %s9, 1
      %p22 = scmp.ne.s32.totalorder %s17, %s19
      %p23 = scmp.eq.s32.totalorder %s9, 0
      %p24 = por %p22, %p23
      %p25 = scmp.ne.s32.totalorder %s17, %s19
      %p26 = scmp.eq.s32.totalorder %s14, 1
      %p27 = por %p25, %p26
      %p28 = scmp.ne.s32.totalorder %s19, %s20
      %p29 = scmp.eq.s32.totalorder %s14, 0
      %p30 = por %p28, %p29
      %p31 = scmp.ne.s32.totalorder %s19, %s20
      %p32 = scmp.eq.s32.totalorder %s15, 1
      %p33 = por %p31, %p32
      %p35 = scmp.ne.s32.totalorder %s20, %s34
      %p36 = scmp.eq.s32.totalorder %s15, 0
      %p37 = por %p35, %p36
      %s39 = sadd.s32 %s38, 1
      %p42 = scmp.eq.s32.totalorder %s9, 1
      %p43 = scmp.ne.s32.totalorder %s38, %s40
      %p44 = scmp.eq.s32.totalorder %s9, 0
      %p45 = por %p43, %p44
      %p46 = scmp.ne.s32.totalorder %s38, %s40
      %p47 = scmp.eq.s32.totalorder %s14, 1
      %p48 = por %p46, %p47
      %p49 = scmp.ne.s32.totalorder %s40, %s41
      %p50 = scmp.eq.s32.totalorder %s14, 0
      %p51 = por %p49, %p50
      %p52 = scmp.ne.s32.totalorder %s40, %s41
      %p53 = scmp.eq.s32.totalorder %s15, 1
      %p54 = por %p52, %p53
      %p56 = scmp.ne.s32.totalorder %s41, %s55
      %p57 = scmp.eq.s32.totalorder %s15, 0
      %p58 = por %p56, %p57
      %p59 = scmp.le.s32.totalorder 1, %s9
      %p60 = scmp.lt.s32.totalorder %s9, 3
      %p61 = pnand %p59, %p60
      %p62 = pneg %p61
      // Predicated region
      $region9: #{tpu_custom_call.1} parent=5 // pred_check
        _
      $region10: #{tpu_custom_call.1} parent=5 // pred_check_branch
        %64 = sbr.rel (%p61) target = $region12
      $region11: #{tpu_custom_call.1} parent=5 // pred_region
        %s65 = ssub.s32 %s9, 1
        // Predicated region
        $region13: #{tpu_custom_call.1} parent=11 // pred_check
          %p66 = pneg %p30
        $region14: #{tpu_custom_call.1} parent=11 // pred_check_branch
          %68 = sbr.rel (%p66) target = $region16
        $region15: #{tpu_custom_call.1} parent=11 // pred_region
          %s70 = ssub.s32 128, 128
          %71 = vsyncadd [#allocation3], %s70
          %s73 = sshll.u32 [#allocation2], 4
          %s74 = int_to_ptr.vmem [resolvable:$true] %s73
          %76 = dma.hbm_to_vmem [thread:$0]  %s0, 128, %s74, [#allocation3]
        $region16: #{tpu_custom_call.1} parent=11 // pred_fallthru
          _
      $region12: #{tpu_custom_call.1} parent=5 // pred_fallthru
        _
      %p77 = scmp.lt.s32.totalorder %s9, 2
      // Predicated region
      $region17: #{tpu_custom_call.1} parent=5 // pred_check
        %p78 = pneg %p77
      $region18: #{tpu_custom_call.1} parent=5 // pred_check_branch
        %80 = sbr.rel (%p78) target = $region20
      $region19: #{tpu_custom_call.1} parent=5 // pred_region
        _
      $region20: #{tpu_custom_call.1} parent=5 // pred_fallthru
        _
      %p81 = scmp.le.s32.totalorder 1, %s9
      %p82 = scmp.lt.s32.totalorder %s9, 3
      %p83 = pnand %p81, %p82
      %p84 = pneg %p83
      // Predicated region
      $region21: #{tpu_custom_call.1} parent=5 // pred_check
        _
      $region22: #{tpu_custom_call.1} parent=5 // pred_check_branch
        %86 = sbr.rel (%p83) target = $region24
      $region23: #{tpu_custom_call.1} parent=5 // pred_region
        %s87 = ssub.s32 %s9, 1
        // Predicated region
        $region25: #{tpu_custom_call.1} parent=23 // pred_check
          %p88 = pneg %p30
        $region26: #{tpu_custom_call.1} parent=23 // pred_check_branch
          %90 = sbr.rel (%p88) target = $region28
        $region27: #{tpu_custom_call.1} parent=23 // pred_region
          %91 = dma.done [#allocation3], 128
        $region28: #{tpu_custom_call.1} parent=23 // pred_fallthru
          _
        %p92 = pneg %p30
        %p93 = pneg %p27
        %p94 = pneg %p51
        %p95 = pneg %p48
        %v96 = vld [vmem:[#allocation2] sm:$0xff]
        %97 = vst [vmem:[#allocation5] sm:$0xff] %v96
        // Predicated region
        $region29: #{tpu_custom_call.1} parent=23 // pred_check
          %p98 = pneg %p48
        $region30: #{tpu_custom_call.1} parent=23 // pred_check_branch
          %100 = sbr.rel (%p98) target = $region32
        $region31: #{tpu_custom_call.1} parent=23 // pred_region
          %s102 = ssub.s32 128, 128
          %103 = vsyncadd [#allocation4], %s102
          %s105 = sshll.u32 [#allocation5], 4
          %s106 = int_to_ptr.vmem [resolvable:$true] %s105
          %108 = dma.vmem_to_hbm [thread:$0]  %s106, 128, %s1, [#allocation4]
        $region32: #{tpu_custom_call.1} parent=23 // pred_fallthru
          _
        // Predicated region
        $region33: #{tpu_custom_call.1} parent=23 // pred_check
          %p109 = pneg %p48
        $region34: #{tpu_custom_call.1} parent=23 // pred_check_branch
          %111 = sbr.rel (%p109) target = $region36
        $region35: #{tpu_custom_call.1} parent=23 // pred_region
          %112 = dma.done [#allocation4], 128
        $region36: #{tpu_custom_call.1} parent=23 // pred_fallthru
          _
      $region24: #{tpu_custom_call.1} parent=5 // pred_fallthru
        _
      %p113 = scmp.le.s32.totalorder 2, %s9
      // Predicated region
      $region37: #{tpu_custom_call.1} parent=5 // pred_check
        %p114 = pneg %p113
      $region38: #{tpu_custom_call.1} parent=5 // pred_check_branch
        %116 = sbr.rel (%p114) target = $region40
      $region39: #{tpu_custom_call.1} parent=5 // pred_region
        %s117 = ssub.s32 %s9, 2
      $region40: #{tpu_custom_call.1} parent=5 // pred_fallthru
        _
    $region6: #{tpu_custom_call.1} parent=1 // loop_footer
      %s13 = sadd.s32 1, %s9
    $region7: #{tpu_custom_call.1} parent=1 // loop_footer_branch
      %8 = sbr.rel target = $region3
    $region8: #{tpu_custom_call.1} parent=1 // loop_exit
      _
    %118 = vsyncpa [#allocation3], 1
    %s119 = scalar_lea.sflag [#allocation3], 1
    %120 = vsyncpa %s119, 1
    %121 = vsyncpa [#allocation4], 1
    %s122 = scalar_lea.sflag [#allocation4], 1
    %123 = vsyncpa %s122, 1

// kernel: tpu_custom_call.1
$region0: #{tpu_custom_call.1}
  #allocation0 [shape = 'u32[]', space=smem, size = 0x4, offset = 0x4, fixed_abs, tag = 'smem constant byte address 0x4 - core index']
  #allocation1 [shape = 'u32[144,128]{1,0:T(1,128)}', space=vmem, size = 0x12000, scoped, tag = 'internal scratch']
  %s0 = inlined_call_operand.vmem [shape: f32[16,426], index: 0, kind: input, shape index: {}]
  %s1 = inlined_call_operand.hbm [shape: bf16[426,384], index: 1, kind: input, shape index: {}]
  %s2 = inlined_call_operand.vmem [shape: f32[1,384], index: 2, kind: input, shape index: {}]
  %s3 = inlined_call_operand.hbm [shape: bf16[384,256], index: 3, kind: input, shape index: {}]
  %s4 = inlined_call_operand.vmem [shape: f32[1,256], index: 4, kind: input, shape index: {}]
  %s5 = inlined_call_operand.hbm [shape: bf16[256,128], index: 5, kind: input, shape index: {}]
  %s6 = inlined_call_operand.vmem [shape: f32[1,128], index: 6, kind: input, shape index: {}]
  %s7 = inlined_call_operand.vmem [shape: bf16[128,8], index: 7, kind: input, shape index: {}]
  %s8 = inlined_call_operand.vmem [shape: f32[1,8], index: 8, kind: input, shape index: {}]
  %s9 = inlined_call_operand.vmem [shape: f32[16,8], index: 9, kind: output, shape index: {}]
  %s10 = sld [smem:[#allocation0]]
  $region58: #{tpu_custom_call.1} parent=0
    _
  %s12 = ssub.s32 1, %s10
  %s13 = scalar_select 0, %s12, %s10
  $region1: #{tpu_custom_call.1} parent=0
    #allocation2 [shape = 'u8[331776]{0}', space=vmem, size = 0x51000, scoped, tag = 'input window, operand 1, single buffered']
    #allocation3 [shape = 's32[1]{0}', space=sflag, size = 0x4, scoped, tag = 'scoped memory for tpu_custom_call.1']
    #allocation4 [shape = 'u8[196608]{0}', space=vmem, size = 0x30000, scoped, tag = 'input window, operand 3, single buffered']
    #allocation5 [shape = 's32[1]{0}', space=sflag, size = 0x4, scoped, tag = 'scoped memory for tpu_custom_call.1']
    #allocation6 [shape = 'u8[65536]{0}', space=vmem, size = 0x10000, scoped, tag = 'input window, operand 5, single buffered']
    %14 = vsyncpa [#allocation3], 0
    %15 = vsyncpa [#allocation5], 0
    // Predicated region
    $region2: #{tpu_custom_call.1} parent=1 // pred_check
      _
    $region3: #{tpu_custom_call.1} parent=1 // pred_check_branch
      %17 = sbr.rel (0) target = $region5
    $region4: #{tpu_custom_call.1} parent=1 // pred_region
      _
    $region5: #{tpu_custom_call.1} parent=1 // pred_fallthru
      _
    // Predicated region
    $region6: #{tpu_custom_call.1} parent=1 // pred_check
      _
    $region7: #{tpu_custom_call.1} parent=1 // pred_check_branch
      %19 = sbr.rel (0) target = $region9
    $region8: #{tpu_custom_call.1} parent=1 // pred_region
      %s21 = ssub.s32 10368, 10368
      %22 = vsyncadd [#allocation3], %s21
      %s23 = sshll.u32 [#allocation2], 4
      %s24 = int_to_ptr.vmem [resolvable:$true] %s23
      %29 = dma.hbm_to_vmem [thread:$0]  %s1, 10368, %s24, [#allocation3], 192, 192, 12
    $region9: #{tpu_custom_call.1} parent=1 // pred_fallthru
      _
    // Predicated region
    $region10: #{tpu_custom_call.1} parent=1 // pred_check
      _
    $region11: #{tpu_custom_call.1} parent=1 // pred_check_branch
      %31 = sbr.rel (0) target = $region13
    $region12: #{tpu_custom_call.1} parent=1 // pred_region
      _
    $region13: #{tpu_custom_call.1} parent=1 // pred_fallthru
      _
    // Predicated region
    $region14: #{tpu_custom_call.1} parent=1 // pred_check
      _
    $region15: #{tpu_custom_call.1} parent=1 // pred_check_branch
      %33 = sbr.rel (0) target = $region17
    $region16: #{tpu_custom_call.1} parent=1 // pred_region
      %s35 = ssub.s32 6144, 6144
      %36 = vsyncadd [#allocation5], %s35
      %s37 = sshll.u32 [#allocation4], 4
      %s38 = int_to_ptr.vmem [resolvable:$true] %s37
      %43 = dma.hbm_to_vmem [thread:$0]  %s3, 6144, %s38, [#allocation5], 128, 128, 8
    $region17: #{tpu_custom_call.1} parent=1 // pred_fallthru
      _
    // Predicated region
    $region18: #{tpu_custom_call.1} parent=1 // pred_check
      _
    $region19: #{tpu_custom_call.1} parent=1 // pred_check_branch
      %45 = sbr.rel (0) target = $region21
    $region20: #{tpu_custom_call.1} parent=1 // pred_region
      _
    $region21: #{tpu_custom_call.1} parent=1 // pred_fallthru
      _
    // Predicated region
    $region22: #{tpu_custom_call.1} parent=1 // pred_check
      _
    $region23: #{tpu_custom_call.1} parent=1 // pred_check_branch
      %47 = sbr.rel (0) target = $region25
    $region24: #{tpu_custom_call.1} parent=1 // pred_region
      %s49 = ssub.s32 2048, 2048
      %50 = vsyncadd [#allocation5], %s49
      %s51 = sshll.u32 [#allocation6], 4
      %s52 = int_to_ptr.vmem [resolvable:$true] %s51
      %57 = dma.hbm_to_vmem [thread:$0]  %s5, 2048, %s52, [#allocation5], 64, 64, 4
    $region25: #{tpu_custom_call.1} parent=1 // pred_fallthru
      _
    // Predicated region
    $region26: #{tpu_custom_call.1} parent=1 // pred_check
      _
    $region27: #{tpu_custom_call.1} parent=1 // pred_check_branch
      %59 = sbr.rel (0) target = $region29
    $region28: #{tpu_custom_call.1} parent=1 // pred_region
      _
    $region29: #{tpu_custom_call.1} parent=1 // pred_fallthru
      _
    // Predicated region
    $region30: #{tpu_custom_call.1} parent=1 // pred_check
      _
    $region31: #{tpu_custom_call.1} parent=1 // pred_check_branch
      %61 = sbr.rel (0) target = $region33
    $region32: #{tpu_custom_call.1} parent=1 // pred_region
      _
    $region33: #{tpu_custom_call.1} parent=1 // pred_fallthru
      _
    // Predicated region
    $region34: #{tpu_custom_call.1} parent=1 // pred_check
      _
    $region35: #{tpu_custom_call.1} parent=1 // pred_check_branch
      %63 = sbr.rel (0) target = $region37
    $region36: #{tpu_custom_call.1} parent=1 // pred_region
      _
    $region37: #{tpu_custom_call.1} parent=1 // pred_fallthru
      _
    // Predicated region
    $region38: #{tpu_custom_call.1} parent=1 // pred_check
      _
    $region39: #{tpu_custom_call.1} parent=1 // pred_check_branch
      %65 = sbr.rel (0) target = $region41
    $region40: #{tpu_custom_call.1} parent=1 // pred_region
      %66 = dma.done [#allocation3], 10368
    $region41: #{tpu_custom_call.1} parent=1 // pred_fallthru
      _
    // Predicated region
    $region42: #{tpu_custom_call.1} parent=1 // pred_check
      _
    $region43: #{tpu_custom_call.1} parent=1 // pred_check_branch
      %68 = sbr.rel (0) target = $region45
    $region44: #{tpu_custom_call.1} parent=1 // pred_region
      %69 = dma.done [#allocation5], 6144
    $region45: #{tpu_custom_call.1} parent=1 // pred_fallthru
      _
    // Predicated region
    $region46: #{tpu_custom_call.1} parent=1 // pred_check
      _
    $region47: #{tpu_custom_call.1} parent=1 // pred_check_branch
      %71 = sbr.rel (0) target = $region49
    $region48: #{tpu_custom_call.1} parent=1 // pred_region
      %72 = dma.done [#allocation5], 2048
    $region49: #{tpu_custom_call.1} parent=1 // pred_fallthru
      _
    %v74 = vld [vmem:[%s0] sm:$0xff]
    %v75 = vld [vmem:[%s0 + $0x8] sm:$0xff]
    %v76 = vld [vmem:[%s0 + $0x10] sm:$0xff]
    %v77 = vld [vmem:[%s0 + $0x18] sm:$0xff]
    %v78 = vld [vmem:[%s0 + $0x20] sm:$0xff]
    %v79 = vld [vmem:[%s0 + $0x28] sm:$0xff]
    %v80 = vld [vmem:[%s0 + $0x30] sm:$0xff]
    %v81 = vld [vmem:[%s0 + $0x38] sm:$0xff]
    %v82 = vpack.c.bf16 %v78, %v74
    %v83 = vpack.c.bf16 %v79, %v75
    %v84 = vpack.c.bf16 %v80, %v76
    %v85 = vpack.c.bf16 %v81, %v77
    %v86 = vld [vmem:[#allocation2] sm:$0xff]
    %v87 = vld [vmem:[#allocation2 + $0x8] sm:$0xf]
    %v88 = vld [vmem:[#allocation2 + $0xc] sm:$0xff]
    %v89 = vld [vmem:[#allocation2 + $0x14] sm:$0xf]
    %v90 = vld [vmem:[#allocation2 + $0x18] sm:$0xff]
    %v91 = vld [vmem:[#allocation2 + $0x20] sm:$0xf]
    %v92 = vld [vmem:[#allocation2 + $0x24] sm:$0xff]
    %v93 = vld [vmem:[#allocation2 + $0x2c] sm:$0xf]
    %v94 = vld [vmem:[#allocation2 + $0x30] sm:$0xff]
    %v95 = vld [vmem:[#allocation2 + $0x38] sm:$0xf]
    %v96 = vld [vmem:[#allocation2 + $0x3c] sm:$0xff]
    %v97 = vld [vmem:[#allocation2 + $0x44] sm:$0xf]
    %v98 = vld [vmem:[#allocation2 + $0x48] sm:$0xff]
    %v99 = vld [vmem:[#allocation2 + $0x50] sm:$0xf]
    %v100 = vld [vmem:[#allocation2 + $0x54] sm:$0xff]
    %v101 = vld [vmem:[#allocation2 + $0x5c] sm:$0xf]
    %v102 = vld [vmem:[#allocation2 + $0x60] sm:$0xff]
    %v103 = vld [vmem:[#allocation2 + $0x68] sm:$0xf]
    %v104 = vld [vmem:[#allocation2 + $0x6c] sm:$0xff]
    %v105 = vld [vmem:[#allocation2 + $0x74] sm:$0xf]
    %v106 = vld [vmem:[#allocation2 + $0x78] sm:$0xff]
    %v107 = vld [vmem:[#allocation2 + $0x80] sm:$0xf]
    %v108 = vld [vmem:[#allocation2 + $0x84] sm:$0xff]
    %v109 = vld [vmem:[#allocation2 + $0x8c] sm:$0xf]
    %v110 = vld [vmem:[#allocation2 + $0x90] sm:$0xff]
    %v111 = vld [vmem:[#allocation2 + $0x98] sm:$0xf]
    %v112 = vld [vmem:[#allocation2 + $0x9c] sm:$0xff]
    %v113 = vld [vmem:[#allocation2 + $0xa4] sm:$0xf]
    %v114 = vld [vmem:[#allocation2 + $0xa8] sm:$0xff]
    %v115 = vld [vmem:[#allocation2 + $0xb0] sm:$0xf]
    %v116 = vld [vmem:[#allocation2 + $0xb4] sm:$0xff]
    %v117 = vld [vmem:[#allocation2 + $0xbc] sm:$0xf]
    %v118 = vld [vmem:[#allocation2 + $0xc0] sm:$0xff]
    %v119 = vld [vmem:[#allocation2 + $0xc8] sm:$0xf]
    %v120 = vld [vmem:[#allocation2 + $0xcc] sm:$0xff]
    %v121 = vld [vmem:[#allocation2 + $0xd4] sm:$0xf]
    %v122 = vld [vmem:[#allocation2 + $0xd8] sm:$0xff]
    %v123 = vld [vmem:[#allocation2 + $0xe0] sm:$0xf]
    %v124 = vld [vmem:[#allocation2 + $0xe4] sm:$0xff]
    %v125 = vld [vmem:[#allocation2 + $0xec] sm:$0xf]
    %v126 = vld [vmem:[#allocation2 + $0xf0] sm:$0xff]
    %v127 = vld [vmem:[#allocation2 + $0xf8] sm:$0xf]
    %v128 = vld [vmem:[#allocation2 + $0xfc] sm:$0xff]
    %v129 = vld [vmem:[#allocation2 + $0x104] sm:$0xf]
    %v130 = vld [vmem:[#allocation2 + $0x108] sm:$0xff]
    %v131 = vld [vmem:[#allocation2 + $0x110] sm:$0xf]
    %v132 = vld [vmem:[#allocation2 + $0x114] sm:$0xff]
    %v133 = vld [vmem:[#allocation2 + $0x11c] sm:$0xf]
    %v134 = vld [vmem:[#allocation2 + $0x120] sm:$0xff]
    %v135 = vld [vmem:[#allocation2 + $0x128] sm:$0xf]
    %v136 = vld [vmem:[#allocation2 + $0x12c] sm:$0xff]
    %v137 = vld [vmem:[#allocation2 + $0x134] sm:$0xf]
    %v138 = vld [vmem:[#allocation2 + $0x138] sm:$0xff]
    %v139 = vld [vmem:[#allocation2 + $0x140] sm:$0xf]
    %v140 = vld [vmem:[#allocation2 + $0x144] sm:$0xff]
    %v141 = vld [vmem:[#allocation2 + $0x14c] sm:$0xf]
    %v142 = vld [vmem:[#allocation2 + $0x150] sm:$0xff]
    %v143 = vld [vmem:[#allocation2 + $0x158] sm:$0xf]
    %v144 = vld [vmem:[#allocation2 + $0x15c] sm:$0xff]
    %v145 = vld [vmem:[#allocation2 + $0x164] sm:$0xf]
    %v146 = vld [vmem:[#allocation2 + $0x168] sm:$0xff]
    %v147 = vld [vmem:[#allocation2 + $0x170] sm:$0xf]
    %v148 = vld [vmem:[#allocation2 + $0x174] sm:$0xff]
    %v149 = vld [vmem:[#allocation2 + $0x17c] sm:$0xf]
    %v150 = vld [vmem:[#allocation2 + $0x180] sm:$0xff]
    %v151 = vld [vmem:[#allocation2 + $0x188] sm:$0xf]
    %v152 = vld [vmem:[#allocation2 + $0x18c] sm:$0xff]
    %v153 = vld [vmem:[#allocation2 + $0x194] sm:$0xf]
    %v154 = vld [vmem:[#allocation2 + $0x198] sm:$0xff]
    %v155 = vld [vmem:[#allocation2 + $0x1a0] sm:$0xf]
    %v156 = vld [vmem:[#allocation2 + $0x1a4] sm:$0xff]
    %v157 = vld [vmem:[#allocation2 + $0x1ac] sm:$0xf]
    %v158 = vld [vmem:[#allocation2 + $0x1b0] sm:$0xff]
    %v159 = vld [vmem:[#allocation2 + $0x1b8] sm:$0xf]
    %v160 = vld [vmem:[#allocation2 + $0x1bc] sm:$0xff]
    %v161 = vld [vmem:[#allocation2 + $0x1c4] sm:$0xf]
    %v162 = vld [vmem:[#allocation2 + $0x1c8] sm:$0xff]
    %v163 = vld [vmem:[#allocation2 + $0x1d0] sm:$0xf]
    %v164 = vld [vmem:[#allocation2 + $0x1d4] sm:$0xff]
    %v165 = vld [vmem:[#allocation2 + $0x1dc] sm:$0xf]
    %v166 = vld [vmem:[#allocation2 + $0x1e0] sm:$0xff]
    %v167 = vld [vmem:[#allocation2 + $0x1e8] sm:$0xf]
    %v168 = vld [vmem:[#allocation2 + $0x1ec] sm:$0xff]
    %v169 = vld [vmem:[#allocation2 + $0x1f4] sm:$0xf]
    %v170 = vld [vmem:[#allocation2 + $0x1f8] sm:$0xff]
    %v171 = vld [vmem:[#allocation2 + $0x200] sm:$0xf]
    %v172 = vld [vmem:[#allocation2 + $0x204] sm:$0xff]
    %v173 = vld [vmem:[#allocation2 + $0x20c] sm:$0xf]
    %v174 = vld [vmem:[#allocation2 + $0x210] sm:$0xff]
    %v175 = vld [vmem:[#allocation2 + $0x218] sm:$0xf]
    %v176 = vld [vmem:[#allocation2 + $0x21c] sm:$0xff]
    %v177 = vld [vmem:[#allocation2 + $0x224] sm:$0xf]
    %v178 = vld [vmem:[#allocation2 + $0x228] sm:$0xff]
    %v179 = vld [vmem:[#allocation2 + $0x230] sm:$0xf]
    %v180 = vld [vmem:[#allocation2 + $0x234] sm:$0xff]
    %v181 = vld [vmem:[#allocation2 + $0x23c] sm:$0xf]
    %v182 = vld [vmem:[#allocation2 + $0x240] sm:$0xff]
    %v183 = vld [vmem:[#allocation2 + $0x248] sm:$0xf]
    %v184 = vld [vmem:[#allocation2 + $0x24c] sm:$0xff]
    %v185 = vld [vmem:[#allocation2 + $0x254] sm:$0xf]
    %v186 = vld [vmem:[#allocation2 + $0x258] sm:$0xff]
    %v187 = vld [vmem:[#allocation2 + $0x260] sm:$0xf]
    %v188 = vld [vmem:[#allocation2 + $0x264] sm:$0xff]
    %v189 = vld [vmem:[#allocation2 + $0x26c] sm:$0xf]
    %v190 = vld [vmem:[#allocation2 + $0x270] sm:$0xff]
    %v191 = vld [vmem:[#allocation2 + $0x278] sm:$0xf]
    %v192 = vld [vmem:[#allocation2 + $0x27c] sm:$0x11]
    %v193 = vld [vmem:[#allocation2 + $0x284] sm:$0x1]
    %v194 = vld [vmem:[%s2] sm:$0x7]
    %v196 = vlaneseq
    %v197 = vshrl.u32 %v196, 7
    %v198 = vsub.s32 0, %v197
    %v199 = vrot.slane %v194, %v198
    %v200 = vlaneseq
    %v201 = vshrl.u32 %v200, 7
    %v202 = vsub.s32 1, %v201
    %v203 = vrot.slane %v194, %v202
    %v204 = vlaneseq
    %v205 = vshrl.u32 %v204, 7
    %v206 = vsub.s32 2, %v205
    %v207 = vrot.slane %v194, %v206
    %v319 = vunpack.c.l.b16 %v86
    %v320 = vunpack.c.h.b16 %v86
    %v321 = vunpack.c.l.b16 %v87
    %v322 = vunpack.c.l.b16 %v88
    %v323 = vunpack.c.h.b16 %v88
    %v324 = vunpack.c.l.b16 %v89
    %v325 = vunpack.c.l.b16 %v90
    %v326 = vunpack.c.h.b16 %v90
    %v327 = vunpack.c.l.b16 %v91
    %v328 = vunpack.c.l.b16 %v92
    %v329 = vunpack.c.h.b16 %v92
    %v330 = vunpack.c.l.b16 %v93
    %v331 = vunpack.c.l.b16 %v94
    %v332 = vunpack.c.h.b16 %v94
    %v333 = vunpack.c.l.b16 %v95
    %v334 = vunpack.c.l.b16 %v96
    %v335 = vunpack.c.h.b16 %v96
    %v336 = vunpack.c.l.b16 %v97
    %v337 = vunpack.c.l.b16 %v98
    %v338 = vunpack.c.h.b16 %v98
    %v339 = vunpack.c.l.b16 %v99
    %v340 = vunpack.c.l.b16 %v100
    %v341 = vunpack.c.h.b16 %v100
    %v342 = vunpack.c.l.b16 %v101
    %v343 = vunpack.c.l.b16 %v102
    %v344 = vunpack.c.h.b16 %v102
    %v345 = vunpack.c.l.b16 %v103
    %v346 = vunpack.c.l.b16 %v104
    %v347 = vunpack.c.h.b16 %v104
    %v348 = vunpack.c.l.b16 %v105
    %v349 = vunpack.c.l.b16 %v106
    %v350 = vunpack.c.h.b16 %v106
    %v351 = vunpack.c.l.b16 %v107
    %v352 = vunpack.c.l.b16 %v108
    %v353 = vunpack.c.h.b16 %v108
    %v354 = vunpack.c.l.b16 %v109
    %v355 = vunpack.c.l.b16 %v110
    %v356 = vunpack.c.h.b16 %v110
    %v357 = vunpack.c.l.b16 %v111
    %v358 = vunpack.c.l.b16 %v112
    %v359 = vunpack.c.h.b16 %v112
    %v360 = vunpack.c.l.b16 %v113
    %v361 = vunpack.c.l.b16 %v114
    %v362 = vunpack.c.h.b16 %v114
    %v363 = vunpack.c.l.b16 %v115
    %v364 = vunpack.c.l.b16 %v116
    %v365 = vunpack.c.h.b16 %v116
    %v366 = vunpack.c.l.b16 %v117
    %v367 = vunpack.c.l.b16 %v118
    %v368 = vunpack.c.h.b16 %v118
    %v369 = vunpack.c.l.b16 %v119
    %v370 = vunpack.c.l.b16 %v120
    %v371 = vunpack.c.h.b16 %v120
    %v372 = vunpack.c.l.b16 %v121
    %v373 = vunpack.c.l.b16 %v122
    %v374 = vunpack.c.h.b16 %v122
    %v375 = vunpack.c.l.b16 %v123
    %v376 = vunpack.c.l.b16 %v124
    %v377 = vunpack.c.h.b16 %v124
    %v378 = vunpack.c.l.b16 %v125
    %v379 = vunpack.c.l.b16 %v126
    %v380 = vunpack.c.h.b16 %v126
    %v381 = vunpack.c.l.b16 %v127
    %v382 = vunpack.c.l.b16 %v128
    %v383 = vunpack.c.h.b16 %v128
    %v384 = vunpack.c.l.b16 %v129
    %v385 = vunpack.c.l.b16 %v130
    %v386 = vunpack.c.h.b16 %v130
    %v387 = vunpack.c.l.b16 %v131
    %v388 = vunpack.c.l.b16 %v132
    %v389 = vunpack.c.h.b16 %v132
    %v390 = vunpack.c.l.b16 %v133
    %v391 = vunpack.c.l.b16 %v134
    %v392 = vunpack.c.h.b16 %v134
    %v393 = vunpack.c.l.b16 %v135
    %v394 = vunpack.c.l.b16 %v136
    %v395 = vunpack.c.h.b16 %v136
    %v396 = vunpack.c.l.b16 %v137
    %v397 = vunpack.c.l.b16 %v138
    %v398 = vunpack.c.h.b16 %v138
    %v399 = vunpack.c.l.b16 %v139
    %v400 = vunpack.c.l.b16 %v140
    %v401 = vunpack.c.h.b16 %v140
    %v402 = vunpack.c.l.b16 %v141
    %v403 = vunpack.c.l.b16 %v142
    %v404 = vunpack.c.h.b16 %v142
    %v405 = vunpack.c.l.b16 %v143
    %v406 = vunpack.c.l.b16 %v144
    %v407 = vunpack.c.h.b16 %v144
    %v408 = vunpack.c.l.b16 %v145
    %v409 = vunpack.c.l.b16 %v146
    %v410 = vunpack.c.h.b16 %v146
    %v411 = vunpack.c.l.b16 %v147
    %v412 = vunpack.c.l.b16 %v148
    %v413 = vunpack.c.h.b16 %v148
    %v414 = vunpack.c.l.b16 %v149
    %v415 = vunpack.c.l.b16 %v150
    %v416 = vunpack.c.h.b16 %v150
    %v417 = vunpack.c.l.b16 %v151
    %v418 = vunpack.c.l.b16 %v152
    %v419 = vunpack.c.h.b16 %v152
    %v420 = vunpack.c.l.b16 %v153
    %v421 = vunpack.c.l.b16 %v154
    %v422 = vunpack.c.h.b16 %v154
    %v423 = vunpack.c.l.b16 %v155
    %v424 = vunpack.c.l.b16 %v156
    %v425 = vunpack.c.h.b16 %v156
    %v426 = vunpack.c.l.b16 %v157
    %v427 = vunpack.c.l.b16 %v158
    %v428 = vunpack.c.h.b16 %v158
    %v429 = vunpack.c.l.b16 %v159
    %v430 = vunpack.c.l.b16 %v160
    %v431 = vunpack.c.h.b16 %v160
    %v432 = vunpack.c.l.b16 %v161
    %v433 = vunpack.c.l.b16 %v162
    %v434 = vunpack.c.h.b16 %v162
    %v435 = vunpack.c.l.b16 %v163
    %v436 = vunpack.c.l.b16 %v164
    %v437 = vunpack.c.h.b16 %v164
    %v438 = vunpack.c.l.b16 %v165
    %v439 = vunpack.c.l.b16 %v166
    %v440 = vunpack.c.h.b16 %v166
    %v441 = vunpack.c.l.b16 %v167
    %v442 = vunpack.c.l.b16 %v168
    %v443 = vunpack.c.h.b16 %v168
    %v444 = vunpack.c.l.b16 %v169
    %v445 = vunpack.c.l.b16 %v170
    %v446 = vunpack.c.h.b16 %v170
    %v447 = vunpack.c.l.b16 %v171
    %v448 = vunpack.c.l.b16 %v172
    %v449 = vunpack.c.h.b16 %v172
    %v450 = vunpack.c.l.b16 %v173
    %v451 = vunpack.c.l.b16 %v174
    %v452 = vunpack.c.h.b16 %v174
    %v453 = vunpack.c.l.b16 %v175
    %v454 = vunpack.c.l.b16 %v176
    %v455 = vunpack.c.h.b16 %v176
    %v456 = vunpack.c.l.b16 %v177
    %v457 = vunpack.c.l.b16 %v178
    %v458 = vunpack.c.h.b16 %v178
    %v459 = vunpack.c.l.b16 %v179
    %v460 = vunpack.c.l.b16 %v180
    %v461 = vunpack.c.h.b16 %v180
    %v462 = vunpack.c.l.b16 %v181
    %v463 = vunpack.c.l.b16 %v182
    %v464 = vunpack.c.h.b16 %v182
    %v465 = vunpack.c.l.b16 %v183
    %v466 = vunpack.c.l.b16 %v184
    %v467 = vunpack.c.h.b16 %v184
    %v468 = vunpack.c.l.b16 %v185
    %v469 = vunpack.c.l.b16 %v186
    %v470 = vunpack.c.h.b16 %v186
    %v471 = vunpack.c.l.b16 %v187
    %v472 = vunpack.c.l.b16 %v188
    %v473 = vunpack.c.h.b16 %v188
    %v474 = vunpack.c.l.b16 %v189
    %v475 = vunpack.c.l.b16 %v190
    %v476 = vunpack.c.h.b16 %v190
    %v477 = vunpack.c.l.b16 %v191
    %v478 = vunpack.c.l.b16 %v192
    %v479 = vunpack.c.h.b16 %v192
    %v480 = vunpack.c.l.b16 %v193
    %v481 = vpack.c.b16 %v322, %v319
    %v482 = vpack.c.b16 %v323, %v320
    %v483 = vpack.c.b16 %v324, %v321
    %v484 = vpack.c.b16 %v328, %v325
    %v485 = vpack.c.b16 %v329, %v326
    %v486 = vpack.c.b16 %v330, %v327
    %v487 = vpack.c.b16 %v334, %v331
    %v488 = vpack.c.b16 %v335, %v332
    %v489 = vpack.c.b16 %v336, %v333
    %v490 = vpack.c.b16 %v340, %v337
    %v491 = vpack.c.b16 %v341, %v338
    %v492 = vpack.c.b16 %v342, %v339
    %v493 = vpack.c.b16 %v346, %v343
    %v494 = vpack.c.b16 %v347, %v344
    %v495 = vpack.c.b16 %v348, %v345
    %v496 = vpack.c.b16 %v352, %v349
    %v497 = vpack.c.b16 %v353, %v350
    %v498 = vpack.c.b16 %v354, %v351
    %v499 = vpack.c.b16 %v358, %v355
    %v500 = vpack.c.b16 %v359, %v356
    %v501 = vpack.c.b16 %v360, %v357
    %v502 = vpack.c.b16 %v364, %v361
    %v503 = vpack.c.b16 %v365, %v362
    %v504 = vpack.c.b16 %v366, %v363
    %v505 = vpack.c.b16 %v370, %v367
    %v506 = vpack.c.b16 %v371, %v368
    %v507 = vpack.c.b16 %v372, %v369
    %v508 = vpack.c.b16 %v376, %v373
    %v509 = vpack.c.b16 %v377, %v374
    %v510 = vpack.c.b16 %v378, %v375
    %v511 = vpack.c.b16 %v382, %v379
    %v512 = vpack.c.b16 %v383, %v380
    %v513 = vpack.c.b16 %v384, %v381
    %v514 = vpack.c.b16 %v388, %v385
    %v515 = vpack.c.b16 %v389, %v386
    %v516 = vpack.c.b16 %v390, %v387
    %v517 = vpack.c.b16 %v394, %v391
    %v518 = vpack.c.b16 %v395, %v392
    %v519 = vpack.c.b16 %v396, %v393
    %v520 = vpack.c.b16 %v400, %v397
    %v521 = vpack.c.b16 %v401, %v398
    %v522 = vpack.c.b16 %v402, %v399
    %v523 = vpack.c.b16 %v406, %v403
    %v524 = vpack.c.b16 %v407, %v404
    %v525 = vpack.c.b16 %v408, %v405
    %v526 = vpack.c.b16 %v412, %v409
    %v527 = vpack.c.b16 %v413, %v410
    %v528 = vpack.c.b16 %v414, %v411
    %v529 = vpack.c.b16 %v418, %v415
    %v530 = vpack.c.b16 %v419, %v416
    %v531 = vpack.c.b16 %v420, %v417
    %v532 = vpack.c.b16 %v424, %v421
    %v533 = vpack.c.b16 %v425, %v422
    %v534 = vpack.c.b16 %v426, %v423
    %v535 = vpack.c.b16 %v430, %v427
    %v536 = vpack.c.b16 %v431, %v428
    %v537 = vpack.c.b16 %v432, %v429
    %v538 = vpack.c.b16 %v436, %v433
    %v539 = vpack.c.b16 %v437, %v434
    %v540 = vpack.c.b16 %v438, %v435
    %v541 = vpack.c.b16 %v442, %v439
    %v542 = vpack.c.b16 %v443, %v440
    %v543 = vpack.c.b16 %v444, %v441
    %v544 = vpack.c.b16 %v448, %v445
    %v545 = vpack.c.b16 %v449, %v446
    %v546 = vpack.c.b16 %v450, %v447
    %v547 = vpack.c.b16 %v454, %v451
    %v548 = vpack.c.b16 %v455, %v452
    %v549 = vpack.c.b16 %v456, %v453
    %v550 = vpack.c.b16 %v460, %v457
    %v551 = vpack.c.b16 %v461, %v458
    %v552 = vpack.c.b16 %v462, %v459
    %v553 = vpack.c.b16 %v466, %v463
    %v554 = vpack.c.b16 %v467, %v464
    %v555 = vpack.c.b16 %v468, %v465
    %v556 = vpack.c.b16 %v472, %v469
    %v557 = vpack.c.b16 %v473, %v470
    %v558 = vpack.c.b16 %v474, %v471
    %v559 = vpack.c.b16 %v478, %v475
    %v560 = vpack.c.b16 %v479, %v476
    %v561 = vpack.c.b16 %v480, %v477
    %vm640 = vcmask 343040
    %v642 = vsel %vm640, %v85, 0
    %vm644 = vcmask 1044480
    %v646 = vsel %vm644, %v559, 0
    %v649 = vsel %vm644, %v560, 0
    %v652 = vsel %vm644, %v561, 0
    %654 = vmatprep.subr.bf16.mxu0 %v482
    %655 = vmatpush1.bf16.msra.mxu0 %v481
    %656 = vmatprep.subr.bf16.mxu0 %v485
    %657 = vmatpush1.bf16.msra.mxu0 %v484
    %658 = vmatprep.subr.bf16.mxu0 %v488
    %659 = vmatpush1.bf16.msra.mxu0 %v487
    %660 = vmatprep.subr.bf16.mxu0 %v491
    %661 = vmatpush1.bf16.msra.mxu0 %v490
    %662 = vmatprep.subr.bf16.mxu0 %v494
    %663 = vmatpush1.bf16.msra.mxu0 %v493
    %664 = vmatprep.subr.bf16.mxu0 %v497
    %665 = vmatpush1.bf16.msra.mxu0 %v496
    %666 = vmatprep.subr.bf16.mxu0 %v500
    %667 = vmatpush1.bf16.msra.mxu0 %v499
    %668 = vmatprep.subr.bf16.mxu0 %v503
    %669 = vmatpush1.bf16.msra.mxu0 %v502
    %670 = vmatprep.subr.bf16.mxu0 %v506
    %671 = vmatpush1.bf16.msra.mxu0 %v505
    %672 = vmatprep.subr.bf16.mxu0 %v509
    %673 = vmatpush1.bf16.msra.mxu0 %v508
    %674 = vmatprep.subr.bf16.mxu0 %v512
    %675 = vmatpush1.bf16.msra.mxu0 %v511
    %676 = vmatprep.subr.bf16.mxu0 %v515
    %677 = vmatpush1.bf16.msra.mxu0 %v514
    %678 = vmatprep.subr.bf16.mxu0 %v518
    %679 = vmatpush1.bf16.msra.mxu0 %v517
    %680 = vmatprep.subr.bf16.mxu0 %v521
    %681 = vmatpush1.bf16.msra.mxu0 %v520
    %682 = vmatprep.subr.bf16.mxu0 %v524
    %683 = vmatpush1.bf16.msra.mxu0 %v523
    %684 = vmatprep.subr.bf16.mxu0 %v527
    %685 = vmatpush1.bf16.msra.mxu0 %v526
    %686 = vmatprep.mubr.bf16.mxu0 %v83
    %687 = vmatmul.mubr.bf16.gmra.mrb[0].mxu0 %v82
    %v688 = vpop.f32.mrb[0].mxu0
    %v689 = vadd.f32 %v199, %v688
    %v690 = vpop.f32.mrb[0].mxu0
    %v691 = vadd.f32 %v203, %v690
    %v692 = vpop.f32.mrb[0].mxu0
    %v693 = vadd.f32 %v199, %v692
    %v694 = vpop.f32.mrb[0].mxu0
    %v695 = vadd.f32 %v203, %v694
    %696 = vdwg.mxu0
    %697 = vmatprep.subr.bf16.mxu0 %v530
    %698 = vmatpush1.bf16.msra.mxu0 %v529
    %699 = vmatprep.subr.bf16.mxu0 %v533
    %700 = vmatpush1.bf16.msra.mxu0 %v532
    %701 = vmatprep.subr.bf16.mxu0 %v536
    %702 = vmatpush1.bf16.msra.mxu0 %v535
    %703 = vmatprep.subr.bf16.mxu0 %v539
    %704 = vmatpush1.bf16.msra.mxu0 %v538
    %705 = vmatprep.subr.bf16.mxu0 %v542
    %706 = vmatpush1.bf16.msra.mxu0 %v541
    %707 = vmatprep.subr.bf16.mxu0 %v545
    %708 = vmatpush1.bf16.msra.mxu0 %v544
    %709 = vmatprep.subr.bf16.mxu0 %v548
    %710 = vmatpush1.bf16.msra.mxu0 %v547
    %711 = vmatprep.subr.bf16.mxu0 %v551
    %712 = vmatpush1.bf16.msra.mxu0 %v550
    %713 = vmatprep.subr.bf16.mxu0 %v554
    %714 = vmatpush1.bf16.msra.mxu0 %v553
    %715 = vmatprep.subr.bf16.mxu0 %v557
    %716 = vmatpush1.bf16.msra.mxu0 %v556
    %717 = vmatprep.subr.bf16.mxu0 %v649
    %718 = vmatpush1.bf16.msra.mxu0 %v646
    %719 = vmatprep.subr.bf16.mxu0 0
    %720 = vmatpush1.bf16.msra.mxu0 0
    %721 = vmatprep.subr.bf16.mxu0 0
    %722 = vmatpush1.bf16.msra.mxu0 0
    %723 = vmatprep.subr.bf16.mxu0 0
    %724 = vmatpush1.bf16.msra.mxu0 0
    %725 = vmatprep.subr.bf16.mxu0 0
    %726 = vmatpush1.bf16.msra.mxu0 0
    %727 = vmatprep.subr.bf16.mxu0 0
    %728 = vmatpush1.bf16.msra.mxu0 0
    %729 = vmatprep.mubr.bf16.mxu0 %v642
    %730 = vmatmul.mubr.bf16.gmra.mrb[0].mxu0 %v84
    %v731 = vpop.f32.mrb[0].mxu0
    %v732 = vadd.f32 %v689, %v731
    %v733 = vpop.f32.mrb[0].mxu0
    %v734 = vadd.f32 %v691, %v733
    %v735 = vpop.f32.mrb[0].mxu0
    %v736 = vadd.f32 %v693, %v735
    %v737 = vpop.f32.mrb[0].mxu0
    %v738 = vadd.f32 %v695, %v737
    %739 = vdwg.mxu0
    %740 = vmatprep.subr.bf16.mxu0 0
    %741 = vmatpush1.bf16.msra.mxu0 %v483
    %742 = vmatprep.subr.bf16.mxu0 0
    %743 = vmatpush1.bf16.msra.mxu0 %v486
    %744 = vmatprep.subr.bf16.mxu0 0
    %745 = vmatpush1.bf16.msra.mxu0 %v489
    %746 = vmatprep.subr.bf16.mxu0 0
    %747 = vmatpush1.bf16.msra.mxu0 %v492
    %748 = vmatprep.subr.bf16.mxu0 0
    %749 = vmatpush1.bf16.msra.mxu0 %v495
    %750 = vmatprep.subr.bf16.mxu0 0
    %751 = vmatpush1.bf16.msra.mxu0 %v498
    %752 = vmatprep.subr.bf16.mxu0 0
    %753 = vmatpush1.bf16.msra.mxu0 %v501
    %754 = vmatprep.subr.bf16.mxu0 0
    %755 = vmatpush1.bf16.msra.mxu0 %v504
    %756 = vmatprep.subr.bf16.mxu0 0
    %757 = vmatpush1.bf16.msra.mxu0 %v507
    %758 = vmatprep.subr.bf16.mxu0 0
    %759 = vmatpush1.bf16.msra.mxu0 %v510
    %760 = vmatprep.subr.bf16.mxu0 0
    %761 = vmatpush1.bf16.msra.mxu0 %v513
    %762 = vmatprep.subr.bf16.mxu0 0
    %763 = vmatpush1.bf16.msra.mxu0 %v516
    %764 = vmatprep.subr.bf16.mxu0 0
    %765 = vmatpush1.bf16.msra.mxu0 %v519
    %766 = vmatprep.subr.bf16.mxu0 0
    %767 = vmatpush1.bf16.msra.mxu0 %v522
    %768 = vmatprep.subr.bf16.mxu0 0
    %769 = vmatpush1.bf16.msra.mxu0 %v525
    %770 = vmatprep.subr.bf16.mxu0 0
    %771 = vmatpush1.bf16.msra.mxu0 %v528
    %772 = vmatprep.mubr.bf16.mxu0 %v83
    %773 = vmatmul.mubr.bf16.gmra.mrb[0].mxu0 %v82
    %v774 = vpop.f32.mrb[0].mxu0
    %v775 = vadd.f32 %v207, %v774
    %v776 = vpop.f32.mrb[0].mxu0
    %v777 = vpop.f32.mrb[0].mxu0
    %v778 = vadd.f32 %v207, %v777
    %v779 = vpop.f32.mrb[0].mxu0
    %780 = vdwg.mxu0
    %781 = vmatprep.subr.bf16.mxu0 0
    %782 = vmatpush1.bf16.msra.mxu0 %v531
    %783 = vmatprep.subr.bf16.mxu0 0
    %784 = vmatpush1.bf16.msra.mxu0 %v534
    %785 = vmatprep.subr.bf16.mxu0 0
    %786 = vmatpush1.bf16.msra.mxu0 %v537
    %787 = vmatprep.subr.bf16.mxu0 0
    %788 = vmatpush1.bf16.msra.mxu0 %v540
    %789 = vmatprep.subr.bf16.mxu0 0
    %790 = vmatpush1.bf16.msra.mxu0 %v543
    %791 = vmatprep.subr.bf16.mxu0 0
    %792 = vmatpush1.bf16.msra.mxu0 %v546
    %793 = vmatprep.subr.bf16.mxu0 0
    %794 = vmatpush1.bf16.msra.mxu0 %v549
    %795 = vmatprep.subr.bf16.mxu0 0
    %796 = vmatpush1.bf16.msra.mxu0 %v552
    %797 = vmatprep.subr.bf16.mxu0 0
    %798 = vmatpush1.bf16.msra.mxu0 %v555
    %799 = vmatprep.subr.bf16.mxu0 0
    %800 = vmatpush1.bf16.msra.mxu0 %v558
    %801 = vmatprep.subr.bf16.mxu0 0
    %802 = vmatpush1.bf16.msra.mxu0 %v652
    %803 = vmatprep.subr.bf16.mxu0 0
    %804 = vmatpush1.bf16.msra.mxu0 0
    %805 = vmatprep.subr.bf16.mxu0 0
    %806 = vmatpush1.bf16.msra.mxu0 0
    %807 = vmatprep.subr.bf16.mxu0 0
    %808 = vmatpush1.bf16.msra.mxu0 0
    %809 = vmatprep.subr.bf16.mxu0 0
    %810 = vmatpush1.bf16.msra.mxu0 0
    %811 = vmatprep.subr.bf16.mxu0 0
    %812 = vmatpush1.bf16.msra.mxu0 0
    %813 = vmatprep.mubr.bf16.mxu0 %v642
    %814 = vmatmul.mubr.bf16.gmra.mrb[0].mxu0 %v84
    %v815 = vpop.f32.mrb[0].mxu0
    %v816 = vadd.f32 %v775, %v815
    %v817 = vpop.f32.mrb[0].mxu0
    %v818 = vpop.f32.mrb[0].mxu0
    %v819 = vadd.f32 %v778, %v818
    %v820 = vpop.f32.mrb[0].mxu0
    %821 = vdwg.mxu0
    %v822 = vmax.f32 %v732, 0.0
    %v823 = vmax.f32 %v734, 0.0
    %v824 = vmax.f32 %v816, 0.0
    %v825 = vmax.f32 %v736, 0.0
    %v826 = vmax.f32 %v738, 0.0
    %v827 = vmax.f32 %v819, 0.0
    %v828 = vpack.c.bf16 %v825, %v822
    %v829 = vpack.c.bf16 %v826, %v823
    %v830 = vpack.c.bf16 %v827, %v824
    %v831 = vld [vmem:[#allocation4] sm:$0xff]
    %v832 = vld [vmem:[#allocation4 + $0x8] sm:$0xff]
    %v833 = vld [vmem:[#allocation4 + $0x10] sm:$0xff]
    %v834 = vld [vmem:[#allocation4 + $0x18] sm:$0xff]
    %v835 = vld [vmem:[#allocation4 + $0x20] sm:$0xff]
    %v836 = vld [vmem:[#allocation4 + $0x28] sm:$0xff]
    %v837 = vld [vmem:[#allocation4 + $0x30] sm:$0xff]
    %v838 = vld [vmem:[#allocation4 + $0x38] sm:$0xff]
    %v839 = vld [vmem:[#allocation4 + $0x40] sm:$0xff]
    %v840 = vld [vmem:[#allocation4 + $0x48] sm:$0xff]
    %v841 = vld [vmem:[#allocation4 + $0x50] sm:$0xff]
    %v842 = vld [vmem:[#allocation4 + $0x58] sm:$0xff]
    %v843 = vld [vmem:[#allocation4 + $0x60] sm:$0xff]
    %v844 = vld [vmem:[#allocation4 + $0x68] sm:$0xff]
    %v845 = vld [vmem:[#allocation4 + $0x70] sm:$0xff]
    %v846 = vld [vmem:[#allocation4 + $0x78] sm:$0xff]
    %v847 = vld [vmem:[#allocation4 + $0x80] sm:$0xff]
    %v848 = vld [vmem:[#allocation4 + $0x88] sm:$0xff]
    %v849 = vld [vmem:[#allocation4 + $0x90] sm:$0xff]
    %v850 = vld [vmem:[#allocation4 + $0x98] sm:$0xff]
    %v851 = vld [vmem:[#allocation4 + $0xa0] sm:$0xff]
    %v852 = vld [vmem:[#allocation4 + $0xa8] sm:$0xff]
    %v853 = vld [vmem:[#allocation4 + $0xb0] sm:$0xff]
    %v854 = vld [vmem:[#allocation4 + $0xb8] sm:$0xff]
    %v855 = vld [vmem:[#allocation4 + $0xc0] sm:$0xff]
    %v856 = vld [vmem:[#allocation4 + $0xc8] sm:$0xff]
    %v857 = vld [vmem:[#allocation4 + $0xd0] sm:$0xff]
    %v858 = vld [vmem:[#allocation4 + $0xd8] sm:$0xff]
    %v859 = vld [vmem:[#allocation4 + $0xe0] sm:$0xff]
    %v860 = vld [vmem:[#allocation4 + $0xe8] sm:$0xff]
    %v861 = vld [vmem:[#allocation4 + $0xf0] sm:$0xff]
    %v862 = vld [vmem:[#allocation4 + $0xf8] sm:$0xff]
    %v863 = vld [vmem:[#allocation4 + $0x100] sm:$0xff]
    %v864 = vld [vmem:[#allocation4 + $0x108] sm:$0xff]
    %v865 = vld [vmem:[#allocation4 + $0x110] sm:$0xff]
    %v866 = vld [vmem:[#allocation4 + $0x118] sm:$0xff]
    %v867 = vld [vmem:[#allocation4 + $0x120] sm:$0xff]
    %v868 = vld [vmem:[#allocation4 + $0x128] sm:$0xff]
    %v869 = vld [vmem:[#allocation4 + $0x130] sm:$0xff]
    %v870 = vld [vmem:[#allocation4 + $0x138] sm:$0xff]
    %v871 = vld [vmem:[#allocation4 + $0x140] sm:$0xff]
    %v872 = vld [vmem:[#allocation4 + $0x148] sm:$0xff]
    %v873 = vld [vmem:[#allocation4 + $0x150] sm:$0xff]
    %v874 = vld [vmem:[#allocation4 + $0x158] sm:$0xff]
    %v875 = vld [vmem:[#allocation4 + $0x160] sm:$0xff]
    %v876 = vld [vmem:[#allocation4 + $0x168] sm:$0xff]
    %v877 = vld [vmem:[#allocation4 + $0x170] sm:$0xff]
    %v878 = vld [vmem:[#allocation4 + $0x178] sm:$0xff]
    %v879 = vld [vmem:[%s4] sm:$0x3]
    %v881 = vlaneseq
    %v882 = vshrl.u32 %v881, 7
    %v883 = vsub.s32 0, %v882
    %v884 = vrot.slane %v879, %v883
    %v885 = vlaneseq
    %v886 = vshrl.u32 %v885, 7
    %v887 = vsub.s32 1, %v886
    %v888 = vrot.slane %v879, %v887
    %v939 = vunpack.c.l.b16 %v831
    %v940 = vunpack.c.h.b16 %v831
    %v941 = vunpack.c.l.b16 %v832
    %v942 = vunpack.c.h.b16 %v832
    %v943 = vunpack.c.l.b16 %v833
    %v944 = vunpack.c.h.b16 %v833
    %v945 = vunpack.c.l.b16 %v834
    %v946 = vunpack.c.h.b16 %v834
    %v947 = vunpack.c.l.b16 %v835
    %v948 = vunpack.c.h.b16 %v835
    %v949 = vunpack.c.l.b16 %v836
    %v950 = vunpack.c.h.b16 %v836
    %v951 = vunpack.c.l.b16 %v837
    %v952 = vunpack.c.h.b16 %v837
    %v953 = vunpack.c.l.b16 %v838
    %v954 = vunpack.c.h.b16 %v838
    %v955 = vunpack.c.l.b16 %v839
    %v956 = vunpack.c.h.b16 %v839
    %v957 = vunpack.c.l.b16 %v840
    %v958 = vunpack.c.h.b16 %v840
    %v959 = vunpack.c.l.b16 %v841
    %v960 = vunpack.c.h.b16 %v841
    %v961 = vunpack.c.l.b16 %v842
    %v962 = vunpack.c.h.b16 %v842
    %v963 = vunpack.c.l.b16 %v843
    %v964 = vunpack.c.h.b16 %v843
    %v965 = vunpack.c.l.b16 %v844
    %v966 = vunpack.c.h.b16 %v844
    %v967 = vunpack.c.l.b16 %v845
    %v968 = vunpack.c.h.b16 %v845
    %v969 = vunpack.c.l.b16 %v846
    %v970 = vunpack.c.h.b16 %v846
    %v971 = vunpack.c.l.b16 %v847
    %v972 = vunpack.c.h.b16 %v847
    %v973 = vunpack.c.l.b16 %v848
    %v974 = vunpack.c.h.b16 %v848
    %v975 = vunpack.c.l.b16 %v849
    %v976 = vunpack.c.h.b16 %v849
    %v977 = vunpack.c.l.b16 %v850
    %v978 = vunpack.c.h.b16 %v850
    %v979 = vunpack.c.l.b16 %v851
    %v980 = vunpack.c.h.b16 %v851
    %v981 = vunpack.c.l.b16 %v852
    %v982 = vunpack.c.h.b16 %v852
    %v983 = vunpack.c.l.b16 %v853
    %v984 = vunpack.c.h.b16 %v853
    %v985 = vunpack.c.l.b16 %v854
    %v986 = vunpack.c.h.b16 %v854
    %v987 = vunpack.c.l.b16 %v855
    %v988 = vunpack.c.h.b16 %v855
    %v989 = vunpack.c.l.b16 %v856
    %v990 = vunpack.c.h.b16 %v856
    %v991 = vunpack.c.l.b16 %v857
    %v992 = vunpack.c.h.b16 %v857
    %v993 = vunpack.c.l.b16 %v858
    %v994 = vunpack.c.h.b16 %v858
    %v995 = vunpack.c.l.b16 %v859
    %v996 = vunpack.c.h.b16 %v859
    %v997 = vunpack.c.l.b16 %v860
    %v998 = vunpack.c.h.b16 %v860
    %v999 = vunpack.c.l.b16 %v861
    %v1000 = vunpack.c.h.b16 %v861
    %v1001 = vunpack.c.l.b16 %v862
    %v1002 = vunpack.c.h.b16 %v862
    %v1003 = vunpack.c.l.b16 %v863
    %v1004 = vunpack.c.h.b16 %v863
    %v1005 = vunpack.c.l.b16 %v864
    %v1006 = vunpack.c.h.b16 %v864
    %v1007 = vunpack.c.l.b16 %v865
    %v1008 = vunpack.c.h.b16 %v865
    %v1009 = vunpack.c.l.b16 %v866
    %v1010 = vunpack.c.h.b16 %v866
    %v1011 = vunpack.c.l.b16 %v867
    %v1012 = vunpack.c.h.b16 %v867
    %v1013 = vunpack.c.l.b16 %v868
    %v1014 = vunpack.c.h.b16 %v868
    %v1015 = vunpack.c.l.b16 %v869
    %v1016 = vunpack.c.h.b16 %v869
    %v1017 = vunpack.c.l.b16 %v870
    %v1018 = vunpack.c.h.b16 %v870
    %v1019 = vunpack.c.l.b16 %v871
    %v1020 = vunpack.c.h.b16 %v871
    %v1021 = vunpack.c.l.b16 %v872
    %v1022 = vunpack.c.h.b16 %v872
    %v1023 = vunpack.c.l.b16 %v873
    %v1024 = vunpack.c.h.b16 %v873
    %v1025 = vunpack.c.l.b16 %v874
    %v1026 = vunpack.c.h.b16 %v874
    %v1027 = vunpack.c.l.b16 %v875
    %v1028 = vunpack.c.h.b16 %v875
    %v1029 = vunpack.c.l.b16 %v876
    %v1030 = vunpack.c.h.b16 %v876
    %v1031 = vunpack.c.l.b16 %v877
    %v1032 = vunpack.c.h.b16 %v877
    %v1033 = vunpack.c.l.b16 %v878
    %v1034 = vunpack.c.h.b16 %v878
    %v1035 = vpack.c.b16 %v941, %v939
    %v1036 = vpack.c.b16 %v942, %v940
    %v1037 = vpack.c.b16 %v945, %v943
    %v1038 = vpack.c.b16 %v946, %v944
    %v1039 = vpack.c.b16 %v949, %v947
    %v1040 = vpack.c.b16 %v950, %v948
    %v1041 = vpack.c.b16 %v953, %v951
    %v1042 = vpack.c.b16 %v954, %v952
    %v1043 = vpack.c.b16 %v957, %v955
    %v1044 = vpack.c.b16 %v958, %v956
    %v1045 = vpack.c.b16 %v961, %v959
    %v1046 = vpack.c.b16 %v962, %v960
    %v1047 = vpack.c.b16 %v965, %v963
    %v1048 = vpack.c.b16 %v966, %v964
    %v1049 = vpack.c.b16 %v969, %v967
    %v1050 = vpack.c.b16 %v970, %v968
    %v1051 = vpack.c.b16 %v973, %v971
    %v1052 = vpack.c.b16 %v974, %v972
    %v1053 = vpack.c.b16 %v977, %v975
    %v1054 = vpack.c.b16 %v978, %v976
    %v1055 = vpack.c.b16 %v981, %v979
    %v1056 = vpack.c.b16 %v982, %v980
    %v1057 = vpack.c.b16 %v985, %v983
    %v1058 = vpack.c.b16 %v986, %v984
    %v1059 = vpack.c.b16 %v989, %v987
    %v1060 = vpack.c.b16 %v990, %v988
    %v1061 = vpack.c.b16 %v993, %v991
    %v1062 = vpack.c.b16 %v994, %v992
    %v1063 = vpack.c.b16 %v997, %v995
    %v1064 = vpack.c.b16 %v998, %v996
    %v1065 = vpack.c.b16 %v1001, %v999
    %v1066 = vpack.c.b16 %v1002, %v1000
    %v1067 = vpack.c.b16 %v1005, %v1003
    %v1068 = vpack.c.b16 %v1006, %v1004
    %v1069 = vpack.c.b16 %v1009, %v1007
    %v1070 = vpack.c.b16 %v1010, %v1008
    %v1071 = vpack.c.b16 %v1013, %v1011
    %v1072 = vpack.c.b16 %v1014, %v1012
    %v1073 = vpack.c.b16 %v1017, %v1015
    %v1074 = vpack.c.b16 %v1018, %v1016
    %v1075 = vpack.c.b16 %v1021, %v1019
    %v1076 = vpack.c.b16 %v1022, %v1020
    %v1077 = vpack.c.b16 %v1025, %v1023
    %v1078 = vpack.c.b16 %v1026, %v1024
    %v1079 = vpack.c.b16 %v1029, %v1027
    %v1080 = vpack.c.b16 %v1030, %v1028
    %v1081 = vpack.c.b16 %v1033, %v1031
    %v1082 = vpack.c.b16 %v1034, %v1032
    %1131 = vmatprep.subr.bf16.mxu0 %v1036
    %1132 = vmatpush1.bf16.msra.mxu0 %v1035
    %1133 = vmatprep.subr.bf16.mxu0 %v1038
    %1134 = vmatpush1.bf16.msra.mxu0 %v1037
    %1135 = vmatprep.subr.bf16.mxu0 %v1040
    %1136 = vmatpush1.bf16.msra.mxu0 %v1039
    %1137 = vmatprep.subr.bf16.mxu0 %v1042
    %1138 = vmatpush1.bf16.msra.mxu0 %v1041
    %1139 = vmatprep.subr.bf16.mxu0 %v1044
    %1140 = vmatpush1.bf16.msra.mxu0 %v1043
    %1141 = vmatprep.subr.bf16.mxu0 %v1046
    %1142 = vmatpush1.bf16.msra.mxu0 %v1045
    %1143 = vmatprep.subr.bf16.mxu0 %v1048
    %1144 = vmatpush1.bf16.msra.mxu0 %v1047
    %1145 = vmatprep.subr.bf16.mxu0 %v1050
    %1146 = vmatpush1.bf16.msra.mxu0 %v1049
    %1147 = vmatprep.subr.bf16.mxu0 %v1052
    %1148 = vmatpush1.bf16.msra.mxu0 %v1051
    %1149 = vmatprep.subr.bf16.mxu0 %v1054
    %1150 = vmatpush1.bf16.msra.mxu0 %v1053
    %1151 = vmatprep.subr.bf16.mxu0 %v1056
    %1152 = vmatpush1.bf16.msra.mxu0 %v1055
    %1153 = vmatprep.subr.bf16.mxu0 %v1058
    %1154 = vmatpush1.bf16.msra.mxu0 %v1057
    %1155 = vmatprep.subr.bf16.mxu0 %v1060
    %1156 = vmatpush1.bf16.msra.mxu0 %v1059
    %1157 = vmatprep.subr.bf16.mxu0 %v1062
    %1158 = vmatpush1.bf16.msra.mxu0 %v1061
    %1159 = vmatprep.subr.bf16.mxu0 %v1064
    %1160 = vmatpush1.bf16.msra.mxu0 %v1063
    %1161 = vmatprep.subr.bf16.mxu0 %v1066
    %1162 = vmatpush1.bf16.msra.mxu0 %v1065
    %1163 = vmatprep.mubr.bf16.mxu0 %v829
    %1164 = vmatmul.mubr.bf16.gmra.mrb[0].mxu0 %v828
    %v1165 = vpop.f32.mrb[0].mxu0
    %v1166 = vadd.f32 %v884, %v1165
    %v1167 = vpop.f32.mrb[0].mxu0
    %v1168 = vadd.f32 %v888, %v1167
    %v1169 = vpop.f32.mrb[0].mxu0
    %v1170 = vadd.f32 %v884, %v1169
    %v1171 = vpop.f32.mrb[0].mxu0
    %v1172 = vadd.f32 %v888, %v1171
    %1173 = vdwg.mxu0
    %1174 = vmatprep.subr.bf16.mxu0 %v1068
    %1175 = vmatpush1.bf16.msra.mxu0 %v1067
    %1176 = vmatprep.subr.bf16.mxu0 %v1070
    %1177 = vmatpush1.bf16.msra.mxu0 %v1069
    %1178 = vmatprep.subr.bf16.mxu0 %v1072
    %1179 = vmatpush1.bf16.msra.mxu0 %v1071
    %1180 = vmatprep.subr.bf16.mxu0 %v1074
    %1181 = vmatpush1.bf16.msra.mxu0 %v1073
    %1182 = vmatprep.subr.bf16.mxu0 %v1076
    %1183 = vmatpush1.bf16.msra.mxu0 %v1075
    %1184 = vmatprep.subr.bf16.mxu0 %v1078
    %1185 = vmatpush1.bf16.msra.mxu0 %v1077
    %1186 = vmatprep.subr.bf16.mxu0 %v1080
    %1187 = vmatpush1.bf16.msra.mxu0 %v1079
    %1188 = vmatprep.subr.bf16.mxu0 %v1082
    %1189 = vmatpush1.bf16.msra.mxu0 %v1081
    %1190 = vmatprep.subr.bf16.mxu0 0
    %1191 = vmatpush1.bf16.msra.mxu0 0
    %1192 = vmatprep.subr.bf16.mxu0 0
    %1193 = vmatpush1.bf16.msra.mxu0 0
    %1194 = vmatprep.subr.bf16.mxu0 0
    %1195 = vmatpush1.bf16.msra.mxu0 0
    %1196 = vmatprep.subr.bf16.mxu0 0
    %1197 = vmatpush1.bf16.msra.mxu0 0
    %1198 = vmatprep.subr.bf16.mxu0 0
    %1199 = vmatpush1.bf16.msra.mxu0 0
    %1200 = vmatprep.subr.bf16.mxu0 0
    %1201 = vmatpush1.bf16.msra.mxu0 0
    %1202 = vmatprep.subr.bf16.mxu0 0
    %1203 = vmatpush1.bf16.msra.mxu0 0
    %1204 = vmatprep.subr.bf16.mxu0 0
    %1205 = vmatpush1.bf16.msra.mxu0 0
    %1206 = vmatprep.mubr.bf16.mxu0 0
    %1207 = vmatmul.mubr.bf16.gmra.mrb[0].mxu0 %v830
    %v1208 = vpop.f32.mrb[0].mxu0
    %v1209 = vadd.f32 %v1166, %v1208
    %v1210 = vpop.f32.mrb[0].mxu0
    %v1211 = vadd.f32 %v1168, %v1210
    %v1212 = vpop.f32.mrb[0].mxu0
    %v1213 = vadd.f32 %v1170, %v1212
    %v1214 = vpop.f32.mrb[0].mxu0
    %v1215 = vadd.f32 %v1172, %v1214
    %1216 = vdwg.mxu0
    %v1217 = vmax.f32 %v1209, 0.0
    %v1218 = vmax.f32 %v1211, 0.0
    %v1219 = vmax.f32 %v1213, 0.0
    %v1220 = vmax.f32 %v1215, 0.0
    %v1221 = vpack.c.bf16 %v1219, %v1217
    %v1222 = vpack.c.bf16 %v1220, %v1218
    %v1223 = vld [vmem:[#allocation6] sm:$0xf]
    %v1224 = vld [vmem:[#allocation6 + $0x4] sm:$0xf]
    %v1225 = vld [vmem:[#allocation6 + $0x8] sm:$0xf]
    %v1226 = vld [vmem:[#allocation6 + $0xc] sm:$0xf]
    %v1227 = vld [vmem:[#allocation6 + $0x10] sm:$0xf]
    %v1228 = vld [vmem:[#allocation6 + $0x14] sm:$0xf]
    %v1229 = vld [vmem:[#allocation6 + $0x18] sm:$0xf]
    %v1230 = vld [vmem:[#allocation6 + $0x1c] sm:$0xf]
    %v1231 = vld [vmem:[#allocation6 + $0x20] sm:$0xf]
    %v1232 = vld [vmem:[#allocation6 + $0x24] sm:$0xf]
    %v1233 = vld [vmem:[#allocation6 + $0x28] sm:$0xf]
    %v1234 = vld [vmem:[#allocation6 + $0x2c] sm:$0xf]
    %v1235 = vld [vmem:[#allocation6 + $0x30] sm:$0xf]
    %v1236 = vld [vmem:[#allocation6 + $0x34] sm:$0xf]
    %v1237 = vld [vmem:[#allocation6 + $0x38] sm:$0xf]
    %v1238 = vld [vmem:[#allocation6 + $0x3c] sm:$0xf]
    %v1239 = vld [vmem:[#allocation6 + $0x40] sm:$0xf]
    %v1240 = vld [vmem:[#allocation6 + $0x44] sm:$0xf]
    %v1241 = vld [vmem:[#allocation6 + $0x48] sm:$0xf]
    %v1242 = vld [vmem:[#allocation6 + $0x4c] sm:$0xf]
    %v1243 = vld [vmem:[#allocation6 + $0x50] sm:$0xf]
    %v1244 = vld [vmem:[#allocation6 + $0x54] sm:$0xf]
    %v1245 = vld [vmem:[#allocation6 + $0x58] sm:$0xf]
    %v1246 = vld [vmem:[#allocation6 + $0x5c] sm:$0xf]
    %v1247 = vld [vmem:[#allocation6 + $0x60] sm:$0xf]
    %v1248 = vld [vmem:[#allocation6 + $0x64] sm:$0xf]
    %v1249 = vld [vmem:[#allocation6 + $0x68] sm:$0xf]
    %v1250 = vld [vmem:[#allocation6 + $0x6c] sm:$0xf]
    %v1251 = vld [vmem:[#allocation6 + $0x70] sm:$0xf]
    %v1252 = vld [vmem:[#allocation6 + $0x74] sm:$0xf]
    %v1253 = vld [vmem:[#allocation6 + $0x78] sm:$0xf]
    %v1254 = vld [vmem:[#allocation6 + $0x7c] sm:$0xf]
    %v1255 = vld [vmem:[%s6] sm:$0x1]
    %v1257 = vlaneseq
    %v1258 = vshrl.u32 %v1257, 7
    %v1259 = vsub.s32 0, %v1258
    %v1260 = vrot.slane %v1255, %v1259
    %v1294 = vunpack.c.l.b16 %v1223
    %v1295 = vunpack.c.l.b16 %v1224
    %v1296 = vunpack.c.l.b16 %v1225
    %v1297 = vunpack.c.l.b16 %v1226
    %v1298 = vunpack.c.l.b16 %v1227
    %v1299 = vunpack.c.l.b16 %v1228
    %v1300 = vunpack.c.l.b16 %v1229
    %v1301 = vunpack.c.l.b16 %v1230
    %v1302 = vunpack.c.l.b16 %v1231
    %v1303 = vunpack.c.l.b16 %v1232
    %v1304 = vunpack.c.l.b16 %v1233
    %v1305 = vunpack.c.l.b16 %v1234
    %v1306 = vunpack.c.l.b16 %v1235
    %v1307 = vunpack.c.l.b16 %v1236
    %v1308 = vunpack.c.l.b16 %v1237
    %v1309 = vunpack.c.l.b16 %v1238
    %v1310 = vunpack.c.l.b16 %v1239
    %v1311 = vunpack.c.l.b16 %v1240
    %v1312 = vunpack.c.l.b16 %v1241
    %v1313 = vunpack.c.l.b16 %v1242
    %v1314 = vunpack.c.l.b16 %v1243
    %v1315 = vunpack.c.l.b16 %v1244
    %v1316 = vunpack.c.l.b16 %v1245
    %v1317 = vunpack.c.l.b16 %v1246
    %v1318 = vunpack.c.l.b16 %v1247
    %v1319 = vunpack.c.l.b16 %v1248
    %v1320 = vunpack.c.l.b16 %v1249
    %v1321 = vunpack.c.l.b16 %v1250
    %v1322 = vunpack.c.l.b16 %v1251
    %v1323 = vunpack.c.l.b16 %v1252
    %v1324 = vunpack.c.l.b16 %v1253
    %v1325 = vunpack.c.l.b16 %v1254
    %v1326 = vpack.c.b16 %v1295, %v1294
    %v1327 = vpack.c.b16 %v1297, %v1296
    %v1328 = vpack.c.b16 %v1299, %v1298
    %v1329 = vpack.c.b16 %v1301, %v1300
    %v1330 = vpack.c.b16 %v1303, %v1302
    %v1331 = vpack.c.b16 %v1305, %v1304
    %v1332 = vpack.c.b16 %v1307, %v1306
    %v1333 = vpack.c.b16 %v1309, %v1308
    %v1334 = vpack.c.b16 %v1311, %v1310
    %v1335 = vpack.c.b16 %v1313, %v1312
    %v1336 = vpack.c.b16 %v1315, %v1314
    %v1337 = vpack.c.b16 %v1317, %v1316
    %v1338 = vpack.c.b16 %v1319, %v1318
    %v1339 = vpack.c.b16 %v1321, %v1320
    %v1340 = vpack.c.b16 %v1323, %v1322
    %v1341 = vpack.c.b16 %v1325, %v1324
    %1358 = vmatprep.subr.bf16.mxu0 0
    %1359 = vmatpush1.bf16.msra.mxu0 %v1326
    %1360 = vmatprep.subr.bf16.mxu0 0
    %1361 = vmatpush1.bf16.msra.mxu0 %v1327
    %1362 = vmatprep.subr.bf16.mxu0 0
    %1363 = vmatpush1.bf16.msra.mxu0 %v1328
    %1364 = vmatprep.subr.bf16.mxu0 0
    %1365 = vmatpush1.bf16.msra.mxu0 %v1329
    %1366 = vmatprep.subr.bf16.mxu0 0
    %1367 = vmatpush1.bf16.msra.mxu0 %v1330
    %1368 = vmatprep.subr.bf16.mxu0 0
    %1369 = vmatpush1.bf16.msra.mxu0 %v1331
    %1370 = vmatprep.subr.bf16.mxu0 0
    %1371 = vmatpush1.bf16.msra.mxu0 %v1332
    %1372 = vmatprep.subr.bf16.mxu0 0
    %1373 = vmatpush1.bf16.msra.mxu0 %v1333
    %1374 = vmatprep.subr.bf16.mxu0 0
    %1375 = vmatpush1.bf16.msra.mxu0 %v1334
    %1376 = vmatprep.subr.bf16.mxu0 0
    %1377 = vmatpush1.bf16.msra.mxu0 %v1335
    %1378 = vmatprep.subr.bf16.mxu0 0
    %1379 = vmatpush1.bf16.msra.mxu0 %v1336
    %1380 = vmatprep.subr.bf16.mxu0 0
    %1381 = vmatpush1.bf16.msra.mxu0 %v1337
    %1382 = vmatprep.subr.bf16.mxu0 0
    %1383 = vmatpush1.bf16.msra.mxu0 %v1338
    %1384 = vmatprep.subr.bf16.mxu0 0
    %1385 = vmatpush1.bf16.msra.mxu0 %v1339
    %1386 = vmatprep.subr.bf16.mxu0 0
    %1387 = vmatpush1.bf16.msra.mxu0 %v1340
    %1388 = vmatprep.subr.bf16.mxu0 0
    %1389 = vmatpush1.bf16.msra.mxu0 %v1341
    %1390 = vmatprep.mubr.bf16.mxu0 %v1222
    %1391 = vmatmul.mubr.bf16.gmra.mrb[0].mxu0 %v1221
    %v1392 = vpop.f32.mrb[0].mxu0
    %v1393 = vadd.f32 %v1260, %v1392
    %v1394 = vpop.f32.mrb[0].mxu0
    %v1395 = vpop.f32.mrb[0].mxu0
    %v1396 = vadd.f32 %v1260, %v1395
    %v1397 = vpop.f32.mrb[0].mxu0
    %1398 = vdwg.mxu0
    %v1399 = vmax.f32 %v1393, 0.0
    %v1400 = vmax.f32 %v1396, 0.0
    %v1401 = vpack.c.bf16 %v1400, %v1399
    %v1402 = vld [vmem:[%s7] sm:$0xf]
    %v1403 = vld [vmem:[%s7 + $0x4] sm:$0xf]
    %v1404 = vld [vmem:[%s7 + $0x8] sm:$0xf]
    %v1405 = vld [vmem:[%s7 + $0xc] sm:$0xf]
    %v1406 = vld [vmem:[%s7 + $0x10] sm:$0xf]
    %v1407 = vld [vmem:[%s7 + $0x14] sm:$0xf]
    %v1408 = vld [vmem:[%s7 + $0x18] sm:$0xf]
    %v1409 = vld [vmem:[%s7 + $0x1c] sm:$0xf]
    %v1410 = vld [vmem:[%s7 + $0x20] sm:$0xf]
    %v1411 = vld [vmem:[%s7 + $0x24] sm:$0xf]
    %v1412 = vld [vmem:[%s7 + $0x28] sm:$0xf]
    %v1413 = vld [vmem:[%s7 + $0x2c] sm:$0xf]
    %v1414 = vld [vmem:[%s7 + $0x30] sm:$0xf]
    %v1415 = vld [vmem:[%s7 + $0x34] sm:$0xf]
    %v1416 = vld [vmem:[%s7 + $0x38] sm:$0xf]
    %v1417 = vld [vmem:[%s7 + $0x3c] sm:$0xf]
    %v1418 = vld [vmem:[%s8] sm:$0x1]
    %v1420 = vlaneseq
    %v1421 = vshrl.u32 %v1420, 7
    %v1422 = vsub.s32 0, %v1421
    %v1423 = vrot.slane %v1418, %v1422
    %v1441 = vunpack.c.l.b16 %v1402
    %v1442 = vunpack.c.l.b16 %v1403
    %v1443 = vunpack.c.l.b16 %v1404
    %v1444 = vunpack.c.l.b16 %v1405
    %v1445 = vunpack.c.l.b16 %v1406
    %v1446 = vunpack.c.l.b16 %v1407
    %v1447 = vunpack.c.l.b16 %v1408
    %v1448 = vunpack.c.l.b16 %v1409
    %v1449 = vunpack.c.l.b16 %v1410
    %v1450 = vunpack.c.l.b16 %v1411
    %v1451 = vunpack.c.l.b16 %v1412
    %v1452 = vunpack.c.l.b16 %v1413
    %v1453 = vunpack.c.l.b16 %v1414
    %v1454 = vunpack.c.l.b16 %v1415
    %v1455 = vunpack.c.l.b16 %v1416
    %v1456 = vunpack.c.l.b16 %v1417
    %v1457 = vpack.c.b16 %v1442, %v1441
    %v1458 = vpack.c.b16 %v1444, %v1443
    %v1459 = vpack.c.b16 %v1446, %v1445
    %v1460 = vpack.c.b16 %v1448, %v1447
    %v1461 = vpack.c.b16 %v1450, %v1449
    %v1462 = vpack.c.b16 %v1452, %v1451
    %v1463 = vpack.c.b16 %v1454, %v1453
    %v1464 = vpack.c.b16 %v1456, %v1455
    %1473 = vmatprep.subr.bf16.mxu0 0
    %1474 = vmatpush1.bf16.msra.mxu0 %v1457
    %1475 = vmatprep.subr.bf16.mxu0 0
    %1476 = vmatpush1.bf16.msra.mxu0 %v1458
    %1477 = vmatprep.subr.bf16.mxu0 0
    %1478 = vmatpush1.bf16.msra.mxu0 %v1459
    %1479 = vmatprep.subr.bf16.mxu0 0
    %1480 = vmatpush1.bf16.msra.mxu0 %v1460
    %1481 = vmatprep.subr.bf16.mxu0 0
    %1482 = vmatpush1.bf16.msra.mxu0 %v1461
    %1483 = vmatprep.subr.bf16.mxu0 0
    %1484 = vmatpush1.bf16.msra.mxu0 %v1462
    %1485 = vmatprep.subr.bf16.mxu0 0
    %1486 = vmatpush1.bf16.msra.mxu0 %v1463
    %1487 = vmatprep.subr.bf16.mxu0 0
    %1488 = vmatpush1.bf16.msra.mxu0 %v1464
    %1489 = vmatprep.subr.bf16.mxu0 0
    %1490 = vmatpush1.bf16.msra.mxu0 0
    %1491 = vmatprep.subr.bf16.mxu0 0
    %1492 = vmatpush1.bf16.msra.mxu0 0
    %1493 = vmatprep.subr.bf16.mxu0 0
    %1494 = vmatpush1.bf16.msra.mxu0 0
    %1495 = vmatprep.subr.bf16.mxu0 0
    %1496 = vmatpush1.bf16.msra.mxu0 0
    %1497 = vmatprep.subr.bf16.mxu0 0
    %1498 = vmatpush1.bf16.msra.mxu0 0
    %1499 = vmatprep.subr.bf16.mxu0 0
    %1500 = vmatpush1.bf16.msra.mxu0 0
    %1501 = vmatprep.subr.bf16.mxu0 0
    %1502 = vmatpush1.bf16.msra.mxu0 0
    %1503 = vmatprep.subr.bf16.mxu0 0
    %1504 = vmatpush1.bf16.msra.mxu0 0
    %1505 = vmatprep.mubr.bf16.mxu0 0
    %1506 = vmatmul.mubr.bf16.gmra.mrb[0].mxu0 %v1401
    %v1507 = vpop.f32.mrb[0].mxu0
    %v1508 = vadd.f32 %v1423, %v1507
    %v1509 = vpop.f32.mrb[0].mxu0
    %v1510 = vpop.f32.mrb[0].mxu0
    %v1511 = vadd.f32 %v1423, %v1510
    %v1512 = vpop.f32.mrb[0].mxu0
    %1513 = vdwg.mxu0
    %v1514 = vmul.f32 %v1508, 1.442695
    %v1515 = vpow.pop %v1514
    %v1516 = vmul.f32 %v1511, 1.442695
    %v1517 = vpow.pop %v1516
    %vm1518 = vcmask 64512
    %1519 = vst.msk [vmem:[%s9] sm:$0xff] %vm1518, %v1515
    %1520 = vst.msk [vmem:[%s9 + $0x8] sm:$0xff] %vm1518, %v1517
    // Predicated region
    $region50: #{tpu_custom_call.1} parent=1 // pred_check
      _
    $region51: #{tpu_custom_call.1} parent=1 // pred_check_branch
      %1522 = sbr.rel (0) target = $region53
    $region52: #{tpu_custom_call.1} parent=1 // pred_region
      _
    $region53: #{tpu_custom_call.1} parent=1 // pred_fallthru
      _
    // Predicated region
    $region54: #{tpu_custom_call.1} parent=1 // pred_check
      _
    $region55: #{tpu_custom_call.1} parent=1 // pred_check_branch
      %1524 = sbr.rel (0) target = $region57
    $region56: #{tpu_custom_call.1} parent=1 // pred_region
      _
    $region57: #{tpu_custom_call.1} parent=1 // pred_fallthru
      _
    %1525 = vsyncpa [#allocation3], 1
    %1526 = vsyncpa [#allocation5], 1

</llo_original>
